<compile_context>
chip_gen: v7x
topology: tpu7x:2x2x1
jax: 0.10.0
libtpu: 0.0.40
codegen_flags: <defaults>
</compile_context>

<pallas_src>
import functools
import math

import jax
import jax.numpy as jnp
from jax import lax
from jax.experimental import pallas as pl
from jax.experimental.pallas import tpu as pltpu


def _round_up(x, m):
    return (x + m - 1) // m * m


def _chip_params():
    """Best-effort (VMEM capacity bytes, TensorCores per chip); safe fallback."""
    vmem_cap = 64 * 1024 * 1024        # conservative default (v7x-class)
    num_tc = 1
    try:
        info = pltpu.get_tpu_info()
        cap = getattr(info, "vmem_capacity_bytes", None)
        if cap:
            vmem_cap = int(cap)
        for attr in ("num_cores", "core_count", "num_tensorcores",
                     "tensorcore_count"):
            v = getattr(info, attr, None)
            if v:
                num_tc = int(v)
                break
    except Exception:
        pass
    try:
        kind = jax.devices()[0].device_kind.lower()
        if "v7" in kind:
            num_tc = max(num_tc, 2)
    except Exception:
        pass
    return vmem_cap, num_tc


def _conv2d_lane_flat_kernel(*refs, taps, has_masks, activation, negative_slope):
    """Direct convolution over a lane-flat (batch*spatial) axis.

    refs (in order):
      x_ref: (Cin, L)            input batch tile, L = b_tile * HWp (lanes)
      w_ref: (KH*KW, Cout, Cin)  per-tap weight matrices (resident)
      b_ref: (Cout, 1)           f32 bias column (lane-broadcast, resident)
      m_ref: (n_masks, L)        0/1 border masks, only if has_masks (resident)
      o_ref: (Cout, L)           output tile, lane-dense wide store

    `taps` is a static tuple of (tap_index, lane_shift, mask_id_or_None).
    """
    if has_masks:
        x_ref, w_ref, b_ref, m_ref, o_ref = refs
    else:
        x_ref, w_ref, b_ref, o_ref = refs
        m_ref = None

    cout, L = o_ref.shape
    x = x_ref[...]                                         # loaded once per step
    # Accumulator initialized with the lane-broadcast bias (saves the final add).
    acc = jnp.broadcast_to(b_ref[...].astype(jnp.float32), (cout, L))

    # Static unroll over the KH*KW taps: each tap is one XLU roll, (optionally)
    # one VALU mask multiply, and one MXU matmul accumulated in f32.
    # TODO(synk): fused-K variant (write shifted taps into an 8-aligned VMEM
    # scratch and do a single (Cout, KH*KW*Cin_pad) @ (.., L) matmul) — needs
    # per-generation measurement (v5e has only 1 vst slot).
    for t, shift, mask_id in taps:
        xs = x if shift == 0 else pltpu.roll(x, shift, 1)
        if mask_id is not None:
            xs = xs * m_ref[pl.ds(mask_id, 1), :]          # zero border taps
        if xs.dtype != w_ref.dtype:
            xs = xs.astype(w_ref.dtype)                    # bf16 path (large convs)
        acc = acc + jnp.dot(w_ref[t], xs, preferred_element_type=jnp.float32)

    if activation == "relu":
        acc = jnp.maximum(acc, 0.0)
    elif activation in ("lrelu", "leaky", "leakyrelu"):
        acc = jnp.where(acc >= 0, acc, negative_slope * acc)
    elif activation == "tanh":
        acc = jnp.tanh(acc)
    elif activation == "sigmoid":
        acc = jax.nn.sigmoid(acc)
    # activation is None -> identity (unknown strings rejected in wrapper)
    o_ref[...] = acc.astype(o_ref.dtype)


def easy_conv2d(x_nchw, weight_oihw, bias=None, *, stride=1, padding="same",
                dilation=1, groups=1, activation=None, negative_slope=0.01):
    """Forward pass of EasyConv2d (non-transposed conv, groups=1, no BN/SN)."""
    # TODO(synk): transposed conv, groups>1, stride>1, dilation>1, use_bn,
    # use_sn, PReLU and callable activations of EasyConv2d are not implemented.
    if stride != 1 or dilation != 1 or groups != 1:
        raise NotImplementedError("only stride=1, dilation=1, groups=1")

    padding = padding.lower()
    assert padding in ("same", "valid")
    if activation is not None:
        if not isinstance(activation, str):
            raise NotImplementedError("only string activations supported")
        activation = activation.lower()
        if activation not in ("relu", "lrelu", "leaky", "leakyrelu",
                              "tanh", "sigmoid"):
            raise ValueError(f"unsupported activation: {activation!r}")

    N, Cin, H, W = x_nchw.shape
    Cout, Cin_w, KH, KW = weight_oihw.shape
    assert Cin_w == Cin

    if padding == "same":
        if KH % 2 == 0 or KW % 2 == 0:
            # TODO(synk): even kernels with 'same' make the PyTorch module
            # output in_size+1 (over-padding); not supported here.
            raise NotImplementedError("'same' padding needs odd kernel sizes")
        ph = (dilation * (KH - 1) - stride + 2) // 2        # module's formula
        pw = (dilation * (KW - 1) - stride + 2) // 2
    else:
        ph = pw = 0
    Ho = H + 2 * ph - KH + 1
    Wo = W + 2 * pw - KW + 1

    HW = H * W
    HWp = _round_up(HW, 128)            # lane-aligned per-image flat length
    dtype = x_nchw.dtype
    itemsize = jnp.dtype(dtype).itemsize

    # Per-tap lane deltas and 0/1 border masks (only for taps that need them).
    p_idx = jnp.arange(HWp, dtype=jnp.int32)
    h_idx = p_idx // W
    w_idx = p_idx % W
    taps_raw, mask_rows = [], []
    for i in range(KH):
        for j in range(KW):
            dh, dw = i - ph, j - pw
            mask_id = None
            if padding == "same" and (dh != 0 or dw != 0):
                valid = jnp.ones((HWp,), bool)
                if dh < 0:
                    valid &= h_idx >= -dh
                if dh > 0:
                    valid &= h_idx < H - dh
                if dw < 0:
                    valid &= w_idx >= -dw
                if dw > 0:
                    valid &= w_idx < W - dw
                mask_id = len(mask_rows)
                mask_rows.append(valid)
            # 'valid' padding: no masks — out-of-range rows/cols get cropped.
            taps_raw.append((i * KW + j, dh * W + dw, mask_id))
    has_masks = bool(mask_rows)

    # ---- chip-aware batch tile + VMEM budget --------------------------------
    vmem_cap, num_tc = _chip_params()
    if vmem_cap <= 72 * 1024 * 1024:        # v7x-class: 64 MiB physical VMEM
        block_budget = 5 * 1024 * 1024
        vmem_limit = 40 * 1024 * 1024
    else:                                   # v5e / v6e: 128 MiB physical VMEM
        block_budget = 10 * 1024 * 1024
        vmem_limit = 64 * 1024 * 1024

    cin_p = _round_up(Cin, 8)
    cout_p = _round_up(Cout, 8)
    per_image = HWp * (2 * (cin_p + cout_p) * itemsize      # double-buffered I/O
                       + 2 * cin_p * itemsize               # x + rolled/masked temps
                       + cout_p * 4                         # f32 accumulator
                       + (8 * itemsize if has_masks else 0))  # resident mask rows
    b_tile_cap = max(1, block_budget // per_image)
    if num_tc >= 2 and N >= 2:
        # Keep >= num_tc grid steps only on multi-TensorCore chips; on 1-TC
        # chips the grid is a serial loop and splitting only adds overhead.
        b_tile_cap = min(b_tile_cap, max(1, N // num_tc))
    b_tile = 1
    for d in range(1, N + 1):
        if N % d == 0 and d <= b_tile_cap:
            b_tile = d
    # TODO(synk): spatial (row) tiling with a KH-1 halo for images whose
    # per-image footprint alone exceeds the block budget (esp. v7x 64 MiB VMEM).

    L = b_tile * HWp
    grid = (N // b_tile,)
    taps = tuple((t, (-delta) % L, mid) for (t, delta, mid) in taps_raw)

    # ---- layout prep: one wrapper transpose to the lane-flat batch axis -----
    x_cn = jnp.transpose(x_nchw, (1, 0, 2, 3)).reshape(Cin, N, HW)
    if HWp != HW:
        x_cn = jnp.pad(x_cn, ((0, 0), (0, 0), (0, HWp - HW)))
    x_flat = x_cn.reshape(Cin, N * HWp)

    # bf16 matmul operands only when large enough to be MXU-bound.
    mm_dtype = weight_oihw.dtype
    if weight_oihw.dtype == jnp.float32 and Cin >= 128 and Cout >= 128:
        mm_dtype = jnp.bfloat16
    w_taps = jnp.transpose(weight_oihw, (2, 3, 0, 1)).reshape(KH * KW, Cout, Cin)
    w_taps = w_taps.astype(mm_dtype)
    if bias is None:
        bias = jnp.zeros((Cout,), jnp.float32)
    b_col = bias.reshape(Cout, 1).astype(jnp.float32)

    kern = functools.partial(_conv2d_lane_flat_kernel, taps=taps,
                             has_masks=has_masks, activation=activation,
                             negative_slope=negative_slope)

    in_specs = [
        pl.BlockSpec((Cin, L), lambda g: (0, g)),
        pl.BlockSpec((KH * KW, Cout, Cin), lambda g: (0, 0, 0)),
        pl.BlockSpec((Cout, 1), lambda g: (0, 0)),
    ]
    operands = [x_flat, w_taps, b_col]
    if has_masks:
        masks = jnp.stack(mask_rows).astype(dtype)          # (n_masks, HWp)
        masks = jnp.tile(masks, (1, b_tile))                # (n_masks, L), resident
        in_specs.append(pl.BlockSpec((masks.shape[0], L), lambda g: (0, 0)))
        operands.append(masks)

    out_flat = pl.pallas_call(
        kern,
        out_shape=jax.ShapeDtypeStruct((Cout, N * HWp), dtype),
        grid=grid,
        in_specs=in_specs,
        out_specs=pl.BlockSpec((Cout, L), lambda g: (0, g)),
        compiler_params=pltpu.CompilerParams(
            dimension_semantics=("parallel",),
            vmem_limit_bytes=vmem_limit),
    )(*operands)

    out = out_flat.reshape(Cout, N, HWp)
    if HWp != HW:
        out = out[:, :, :HW]
    out = out.reshape(Cout, N, H, W).transpose(1, 0, 2, 3)   # back to NCHW
    if Ho != H or Wo != W:                                   # 'valid' crop
        out = out[:, :, :Ho, :Wo]
    return out


if __name__ == "__main__":
    # EasyConv2d(in_channels=4, out_channels=8, kernel_size=3, stride=1,
    #            padding='same', activation='relu', use_bias=True)
    N, Cin, H, W = 2, 4, 16, 16
    Cout, K = 8, 3

    key = jax.random.PRNGKey(0)
    kx, kw, kb = jax.random.split(key, 3)

    x = jax.random.normal(kx, (N, Cin, H, W), dtype=jnp.float32)

    fan_in = Cin * K * K
    bound = 1.0 / math.sqrt(fan_in)
    weight = jax.random.uniform(kw, (Cout, Cin, K, K), jnp.float32,
                                minval=-bound, maxval=bound)
    bias = jax.random.uniform(kb, (Cout,), jnp.float32,
                              minval=-bound, maxval=bound)

    # --- 'same' padding + relu ---
    out = easy_conv2d(x, weight, bias, activation="relu")
    out = jax.block_until_ready(out)
    ref = lax.conv_general_dilated(
        x, weight, window_strides=(1, 1), padding=[(1, 1), (1, 1)],
        dimension_numbers=("NCHW", "OIHW", "NCHW"))
    ref = jnp.maximum(ref + bias.reshape(1, -1, 1, 1), 0.0)
    assert out.shape == (N, Cout, H, W)
    assert jnp.allclose(out, ref, atol=1e-4, rtol=1e-4)

    # --- 'valid' padding + leaky-relu (pins roll wraparound / crop behavior) ---
    out_v = easy_conv2d(x, weight, bias, padding="valid", activation="lrelu")
    out_v = jax.block_until_ready(out_v)
    ref_v = lax.conv_general_dilated(
        x, weight, window_strides=(1, 1), padding="VALID",
        dimension_numbers=("NCHW", "OIHW", "NCHW"))
    ref_v = ref_v + bias.reshape(1, -1, 1, 1)
    ref_v = jnp.where(ref_v >= 0, ref_v, 0.01 * ref_v)
    assert out_v.shape == (N, Cout, H - K + 1, W - K + 1)
    assert jnp.allclose(out_v, ref_v, atol=1e-4, rtol=1e-4)

    print("KERNEL_OK")
</pallas_src>

<mosaic_0001>
module attributes {stable_mosaic.version = 11 : i64} {
  func.func @_conv2d_lane_flat_kernel(%arg0: i32, %arg1: memref<4x512xf32, #tpu.memory_space<vmem>>, %arg2: memref<9x8x4xf32, #tpu.memory_space<vmem>>, %arg3: memref<8x1xf32, #tpu.memory_space<vmem>>, %arg4: memref<8x512xf32, #tpu.memory_space<vmem>>, %arg5: memref<8x512xf32, #tpu.memory_space<vmem>>) attributes {dimension_semantics = [#tpu.dimension_semantics<parallel>], iteration_bounds = array<i64: 1>, scalar_prefetch = 0 : i64, scratch_operands = 0 : i64, tpu.core_type = #tpu.core_type<tc>, window_params = [{transform_indices = @transform_0, window_bounds = array<i64: 4, 512>}, {pipeline_mode = #tpu.pipeline_mode<synchronous>, transform_indices = @transform_1, window_bounds = array<i64: 9, 8, 4>}, {pipeline_mode = #tpu.pipeline_mode<synchronous>, transform_indices = @transform_2, window_bounds = array<i64: 8, 1>}, {pipeline_mode = #tpu.pipeline_mode<synchronous>, transform_indices = @transform_3, window_bounds = array<i64: 8, 512>}, {transform_indices = @transform_4, window_bounds = array<i64: 8, 512>}]} {
    %c0 = arith.constant 0 : index
    %c0_0 = arith.constant 0 : index
    %0 = vector.load %arg1[%c0, %c0_0] : memref<4x512xf32, #tpu.memory_space<vmem>>, vector<4x512xf32>
    %c0_1 = arith.constant 0 : index
    %c0_2 = arith.constant 0 : index
    %1 = vector.load %arg3[%c0_1, %c0_2] : memref<8x1xf32, #tpu.memory_space<vmem>>, vector<8x1xf32>
    %2 = vector.shape_cast %1 : vector<8x1xf32> to vector<8x1xf32>
    %3 = vector.broadcast %2 : vector<8x1xf32> to vector<8x512xf32>
    %c17_i32 = arith.constant 17 : i32
    %4 = tpu.dynamic_rotate %0 by %c17_i32 dim 1 : vector<4x512xf32>, i32 -> vector<4x512xf32>
    %c0_3 = arith.constant 0 : index
    %c0_4 = arith.constant 0 : index
    %5 = vector.load %arg4[%c0_3, %c0_4] : memref<8x512xf32, #tpu.memory_space<vmem>>, vector<1x512xf32>
    %6 = vector.broadcast %5 : vector<1x512xf32> to vector<4x512xf32>
    %7 = arith.mulf %4, %6 : vector<4x512xf32>
    %c0_5 = arith.constant 0 : index
    %c0_6 = arith.constant 0 : index
    %c0_7 = arith.constant 0 : index
    %8 = vector.load %arg2[%c0_5, %c0_6, %c0_7] : memref<9x8x4xf32, #tpu.memory_space<vmem>>, vector<1x8x4xf32>
    %9 = vector.shape_cast %8 : vector<1x8x4xf32> to vector<8x4xf32>
    %cst = arith.constant dense<0.000000e+00> : vector<8x512xf32>
    %10 = tpu.matmul %9, %7, %cst {dimension_numbers = #tpu.dot_dimension_numbers<[1], [0], [0], [1], [0, 0, 1, 1], [], []>} : vector<8x4xf32>, vector<4x512xf32>, vector<8x512xf32> -> vector<8x512xf32>
    %11 = arith.addf %3, %10 : vector<8x512xf32>
    %c16_i32 = arith.constant 16 : i32
    %12 = tpu.dynamic_rotate %0 by %c16_i32 dim 1 : vector<4x512xf32>, i32 -> vector<4x512xf32>
    %c1 = arith.constant 1 : index
    %c0_8 = arith.constant 0 : index
    %13 = vector.load %arg4[%c1, %c0_8] : memref<8x512xf32, #tpu.memory_space<vmem>>, vector<1x512xf32>
    %14 = vector.broadcast %13 : vector<1x512xf32> to vector<4x512xf32>
    %15 = arith.mulf %12, %14 : vector<4x512xf32>
    %c1_9 = arith.constant 1 : index
    %c0_10 = arith.constant 0 : index
    %c0_11 = arith.constant 0 : index
    %16 = vector.load %arg2[%c1_9, %c0_10, %c0_11] : memref<9x8x4xf32, #tpu.memory_space<vmem>>, vector<1x8x4xf32>
    %17 = vector.shape_cast %16 : vector<1x8x4xf32> to vector<8x4xf32>
    %cst_12 = arith.constant dense<0.000000e+00> : vector<8x512xf32>
    %18 = tpu.matmul %17, %15, %cst_12 {dimension_numbers = #tpu.dot_dimension_numbers<[1], [0], [0], [1], [0, 0, 1, 1], [], []>} : vector<8x4xf32>, vector<4x512xf32>, vector<8x512xf32> -> vector<8x512xf32>
    %19 = arith.addf %11, %18 : vector<8x512xf32>
    %c15_i32 = arith.constant 15 : i32
    %20 = tpu.dynamic_rotate %0 by %c15_i32 dim 1 : vector<4x512xf32>, i32 -> vector<4x512xf32>
    %c2 = arith.constant 2 : index
    %c0_13 = arith.constant 0 : index
    %21 = vector.load %arg4[%c2, %c0_13] : memref<8x512xf32, #tpu.memory_space<vmem>>, vector<1x512xf32>
    %22 = vector.broadcast %21 : vector<1x512xf32> to vector<4x512xf32>
    %23 = arith.mulf %20, %22 : vector<4x512xf32>
    %c2_14 = arith.constant 2 : index
    %c0_15 = arith.constant 0 : index
    %c0_16 = arith.constant 0 : index
    %24 = vector.load %arg2[%c2_14, %c0_15, %c0_16] : memref<9x8x4xf32, #tpu.memory_space<vmem>>, vector<1x8x4xf32>
    %25 = vector.shape_cast %24 : vector<1x8x4xf32> to vector<8x4xf32>
    %cst_17 = arith.constant dense<0.000000e+00> : vector<8x512xf32>
    %26 = tpu.matmul %25, %23, %cst_17 {dimension_numbers = #tpu.dot_dimension_numbers<[1], [0], [0], [1], [0, 0, 1, 1], [], []>} : vector<8x4xf32>, vector<4x512xf32>, vector<8x512xf32> -> vector<8x512xf32>
    %27 = arith.addf %19, %26 : vector<8x512xf32>
    %c1_i32 = arith.constant 1 : i32
    %28 = tpu.dynamic_rotate %0 by %c1_i32 dim 1 : vector<4x512xf32>, i32 -> vector<4x512xf32>
    %c3 = arith.constant 3 : index
    %c0_18 = arith.constant 0 : index
    %29 = vector.load %arg4[%c3, %c0_18] : memref<8x512xf32, #tpu.memory_space<vmem>>, vector<1x512xf32>
    %30 = vector.broadcast %29 : vector<1x512xf32> to vector<4x512xf32>
    %31 = arith.mulf %28, %30 : vector<4x512xf32>
    %c3_19 = arith.constant 3 : index
    %c0_20 = arith.constant 0 : index
    %c0_21 = arith.constant 0 : index
    %32 = vector.load %arg2[%c3_19, %c0_20, %c0_21] : memref<9x8x4xf32, #tpu.memory_space<vmem>>, vector<1x8x4xf32>
    %33 = vector.shape_cast %32 : vector<1x8x4xf32> to vector<8x4xf32>
    %cst_22 = arith.constant dense<0.000000e+00> : vector<8x512xf32>
    %34 = tpu.matmul %33, %31, %cst_22 {dimension_numbers = #tpu.dot_dimension_numbers<[1], [0], [0], [1], [0, 0, 1, 1], [], []>} : vector<8x4xf32>, vector<4x512xf32>, vector<8x512xf32> -> vector<8x512xf32>
    %35 = arith.addf %27, %34 : vector<8x512xf32>
    %c4 = arith.constant 4 : index
    %c0_23 = arith.constant 0 : index
    %c0_24 = arith.constant 0 : index
    %36 = vector.load %arg2[%c4, %c0_23, %c0_24] : memref<9x8x4xf32, #tpu.memory_space<vmem>>, vector<1x8x4xf32>
    %37 = vector.shape_cast %36 : vector<1x8x4xf32> to vector<8x4xf32>
    %cst_25 = arith.constant dense<0.000000e+00> : vector<8x512xf32>
    %38 = tpu.matmul %37, %0, %cst_25 {dimension_numbers = #tpu.dot_dimension_numbers<[1], [0], [0], [1], [0, 0, 1, 1], [], []>} : vector<8x4xf32>, vector<4x512xf32>, vector<8x512xf32> -> vector<8x512xf32>
    %39 = arith.addf %35, %38 : vector<8x512xf32>
    %c511_i32 = arith.constant 511 : i32
    %40 = tpu.dynamic_rotate %0 by %c511_i32 dim 1 : vector<4x512xf32>, i32 -> vector<4x512xf32>
    %c4_26 = arith.constant 4 : index
    %c0_27 = arith.constant 0 : index
    %41 = vector.load %arg4[%c4_26, %c0_27] : memref<8x512xf32, #tpu.memory_space<vmem>>, vector<1x512xf32>
    %42 = vector.broadcast %41 : vector<1x512xf32> to vector<4x512xf32>
    %43 = arith.mulf %40, %42 : vector<4x512xf32>
    %c5 = arith.constant 5 : index
    %c0_28 = arith.constant 0 : index
    %c0_29 = arith.constant 0 : index
    %44 = vector.load %arg2[%c5, %c0_28, %c0_29] : memref<9x8x4xf32, #tpu.memory_space<vmem>>, vector<1x8x4xf32>
    %45 = vector.shape_cast %44 : vector<1x8x4xf32> to vector<8x4xf32>
    %cst_30 = arith.constant dense<0.000000e+00> : vector<8x512xf32>
    %46 = tpu.matmul %45, %43, %cst_30 {dimension_numbers = #tpu.dot_dimension_numbers<[1], [0], [0], [1], [0, 0, 1, 1], [], []>} : vector<8x4xf32>, vector<4x512xf32>, vector<8x512xf32> -> vector<8x512xf32>
    %47 = arith.addf %39, %46 : vector<8x512xf32>
    %c497_i32 = arith.constant 497 : i32
    %48 = tpu.dynamic_rotate %0 by %c497_i32 dim 1 : vector<4x512xf32>, i32 -> vector<4x512xf32>
    %c5_31 = arith.constant 5 : index
    %c0_32 = arith.constant 0 : index
    %49 = vector.load %arg4[%c5_31, %c0_32] : memref<8x512xf32, #tpu.memory_space<vmem>>, vector<1x512xf32>
    %50 = vector.broadcast %49 : vector<1x512xf32> to vector<4x512xf32>
    %51 = arith.mulf %48, %50 : vector<4x512xf32>
    %c6 = arith.constant 6 : index
    %c0_33 = arith.constant 0 : index
    %c0_34 = arith.constant 0 : index
    %52 = vector.load %arg2[%c6, %c0_33, %c0_34] : memref<9x8x4xf32, #tpu.memory_space<vmem>>, vector<1x8x4xf32>
    %53 = vector.shape_cast %52 : vector<1x8x4xf32> to vector<8x4xf32>
    %cst_35 = arith.constant dense<0.000000e+00> : vector<8x512xf32>
    %54 = tpu.matmul %53, %51, %cst_35 {dimension_numbers = #tpu.dot_dimension_numbers<[1], [0], [0], [1], [0, 0, 1, 1], [], []>} : vector<8x4xf32>, vector<4x512xf32>, vector<8x512xf32> -> vector<8x512xf32>
    %55 = arith.addf %47, %54 : vector<8x512xf32>
    %c496_i32 = arith.constant 496 : i32
    %56 = tpu.dynamic_rotate %0 by %c496_i32 dim 1 : vector<4x512xf32>, i32 -> vector<4x512xf32>
    %c6_36 = arith.constant 6 : index
    %c0_37 = arith.constant 0 : index
    %57 = vector.load %arg4[%c6_36, %c0_37] : memref<8x512xf32, #tpu.memory_space<vmem>>, vector<1x512xf32>
    %58 = vector.broadcast %57 : vector<1x512xf32> to vector<4x512xf32>
    %59 = arith.mulf %56, %58 : vector<4x512xf32>
    %c7 = arith.constant 7 : index
    %c0_38 = arith.constant 0 : index
    %c0_39 = arith.constant 0 : index
    %60 = vector.load %arg2[%c7, %c0_38, %c0_39] : memref<9x8x4xf32, #tpu.memory_space<vmem>>, vector<1x8x4xf32>
    %61 = vector.shape_cast %60 : vector<1x8x4xf32> to vector<8x4xf32>
    %cst_40 = arith.constant dense<0.000000e+00> : vector<8x512xf32>
    %62 = tpu.matmul %61, %59, %cst_40 {dimension_numbers = #tpu.dot_dimension_numbers<[1], [0], [0], [1], [0, 0, 1, 1], [], []>} : vector<8x4xf32>, vector<4x512xf32>, vector<8x512xf32> -> vector<8x512xf32>
    %63 = arith.addf %55, %62 : vector<8x512xf32>
    %c495_i32 = arith.constant 495 : i32
    %64 = tpu.dynamic_rotate %0 by %c495_i32 dim 1 : vector<4x512xf32>, i32 -> vector<4x512xf32>
    %c7_41 = arith.constant 7 : index
    %c0_42 = arith.constant 0 : index
    %65 = vector.load %arg4[%c7_41, %c0_42] : memref<8x512xf32, #tpu.memory_space<vmem>>, vector<1x512xf32>
    %66 = vector.broadcast %65 : vector<1x512xf32> to vector<4x512xf32>
    %67 = arith.mulf %64, %66 : vector<4x512xf32>
    %c8 = arith.constant 8 : index
    %c0_43 = arith.constant 0 : index
    %c0_44 = arith.constant 0 : index
    %68 = vector.load %arg2[%c8, %c0_43, %c0_44] : memref<9x8x4xf32, #tpu.memory_space<vmem>>, vector<1x8x4xf32>
    %69 = vector.shape_cast %68 : vector<1x8x4xf32> to vector<8x4xf32>
    %cst_45 = arith.constant dense<0.000000e+00> : vector<8x512xf32>
    %70 = tpu.matmul %69, %67, %cst_45 {dimension_numbers = #tpu.dot_dimension_numbers<[1], [0], [0], [1], [0, 0, 1, 1], [], []>} : vector<8x4xf32>, vector<4x512xf32>, vector<8x512xf32> -> vector<8x512xf32>
    %71 = arith.addf %63, %70 : vector<8x512xf32>
    %cst_46 = arith.constant 0.000000e+00 : f32
    %72 = vector.broadcast %cst_46 : f32 to vector<8x512xf32>
    %73 = arith.maximumf %71, %72 : vector<8x512xf32>
    %c0_47 = arith.constant 0 : index
    %c0_48 = arith.constant 0 : index
    %74 = vector.load %arg5[%c0_47, %c0_48] : memref<8x512xf32, #tpu.memory_space<vmem>>, vector<8x512xf32>
    tpu.vector_store %arg5[%c0_47, %c0_48], %73 {strides = array<i32>} : memref<8x512xf32, #tpu.memory_space<vmem>>, vector<8x512xf32>,
    return
  }
  func.func @transform_0(%arg0: i32) -> (i32, i32) {
    %c0_i32 = arith.constant 0 : i32
    %c0_i32_0 = arith.constant 0 : i32
    return %c0_i32, %arg0 : i32, i32
  }
  func.func @transform_1(%arg0: i32) -> (i32, i32, i32) {
    %c0_i32 = arith.constant 0 : i32
    %c0_i32_0 = arith.constant 0 : i32
    %c0_i32_1 = arith.constant 0 : i32
    %c0_i32_2 = arith.constant 0 : i32
    return %c0_i32, %c0_i32_0, %c0_i32_1 : i32, i32, i32
  }
  func.func @transform_2(%arg0: i32) -> (i32, i32) {
    %c0_i32 = arith.constant 0 : i32
    %c0_i32_0 = arith.constant 0 : i32
    %c0_i32_1 = arith.constant 0 : i32
    return %c0_i32, %c0_i32_0 : i32, i32
  }
  func.func @transform_3(%arg0: i32) -> (i32, i32) {
    %c0_i32 = arith.constant 0 : i32
    %c0_i32_0 = arith.constant 0 : i32
    %c0_i32_1 = arith.constant 0 : i32
    return %c0_i32, %c0_i32_0 : i32, i32
  }
  func.func @transform_4(%arg0: i32) -> (i32, i32) {
    %c0_i32 = arith.constant 0 : i32
    %c0_i32_0 = arith.constant 0 : i32
    return %c0_i32, %arg0 : i32, i32
  }
}

</mosaic_0001>

<llo_original>
// kernel: tpu_custom_call.1
$region0: #{tpu_custom_call.1}
  #allocation0 [shape = 'u32[]', space=smem, size = 0x4, offset = 0x4, fixed_abs, tag = 'smem constant byte address 0x4 - core index']
  #allocation1 [shape = 'u32[144,128]{1,0:T(1,128)}', space=vmem, size = 0x12000, scoped, tag = 'internal scratch']
  %s0 = inlined_call_operand.vmem [shape: f32[4,512], index: 0, kind: input, shape index: {}]
  %s1 = inlined_call_operand.vmem [shape: f32[9,8,4], index: 1, kind: input, shape index: {}]
  %s2 = inlined_call_operand.vmem [shape: f32[8,1], index: 2, kind: input, shape index: {}]
  %s3 = inlined_call_operand.vmem [shape: f32[8,512], index: 3, kind: input, shape index: {}]
  %s4 = inlined_call_operand.hbm [shape: f32[8,512], index: 4, kind: output, shape index: {}]
  %s5 = sld [smem:[#allocation0]]
  $region26: #{tpu_custom_call.1} parent=0
    _
  %s7 = ssub.s32 1, %s5
  %s8 = scalar_select 0, %s7, %s5
  $region1: #{tpu_custom_call.1} parent=0
    #allocation2 [shape = 'u8[16384]{0}', space=vmem, size = 0x4000, scoped, tag = 'output window, operand 0, single buffered']
    #allocation3 [shape = 's32[1]{0}', space=sflag, size = 0x4, scoped, tag = 'scoped memory for tpu_custom_call.1']
    %9 = vsyncpa [#allocation3], 0
    // Predicated region
    $region2: #{tpu_custom_call.1} parent=1 // pred_check
      _
    $region3: #{tpu_custom_call.1} parent=1 // pred_check_branch
      %11 = sbr.rel (0) target = $region5
    $region4: #{tpu_custom_call.1} parent=1 // pred_region
      _
    $region5: #{tpu_custom_call.1} parent=1 // pred_fallthru
      _
    // Predicated region
    $region6: #{tpu_custom_call.1} parent=1 // pred_check
      _
    $region7: #{tpu_custom_call.1} parent=1 // pred_check_branch
      %13 = sbr.rel (0) target = $region9
    $region8: #{tpu_custom_call.1} parent=1 // pred_region
      _
    $region9: #{tpu_custom_call.1} parent=1 // pred_fallthru
      _
    // Predicated region
    $region10: #{tpu_custom_call.1} parent=1 // pred_check
      _
    $region11: #{tpu_custom_call.1} parent=1 // pred_check_branch
      %15 = sbr.rel (0) target = $region13
    $region12: #{tpu_custom_call.1} parent=1 // pred_region
      _
    $region13: #{tpu_custom_call.1} parent=1 // pred_fallthru
      _
    // Predicated region
    $region14: #{tpu_custom_call.1} parent=1 // pred_check
      _
    $region15: #{tpu_custom_call.1} parent=1 // pred_check_branch
      %17 = sbr.rel (0) target = $region17
    $region16: #{tpu_custom_call.1} parent=1 // pred_region
      _
    $region17: #{tpu_custom_call.1} parent=1 // pred_fallthru
      _
    %v18 = vld [vmem:[%s0] sm:$0xff]
    %v19 = vld [vmem:[%s0 + $0x8] sm:$0xff]
    %v20 = vld [vmem:[%s2] sm:$0xff]
    %22 = vset.pattern.permute.xlu0 0
    %23 = vperm.xlu0 %22, %v20
    %v24 = vpop.permute.xlu0 %23
    %v28 = vcombine.high %v18, %v18
    %v29 = vcombine.high %v19, %v19
    %32 = vrot.lane.b32.xlu0 %v18, 17
    %v33 = vpop.permute.xlu0 %32
    %34 = vrot.lane.b32.xlu0 %v28, 17
    %v35 = vpop.permute.xlu0 %34
    %36 = vrot.lane.b32.xlu0 %v19, 17
    %v37 = vpop.permute.xlu0 %36
    %38 = vrot.lane.b32.xlu0 %v29, 17
    %v39 = vpop.permute.xlu0 %38
    %v40 = vlaneseq
    %v41 = vand.u32 %v40, 127
    %vm42 = vcmp.lt.s32.totalorder %v41, 17
    %v43 = vsel %vm42, %v37, %v39
    %v44 = vsel %vm42, %v35, %v37
    %v45 = vsel %vm42, %v33, %v35
    %v46 = vsel %vm42, %v39, %v33
    %v47 = vld [vmem:[%s3] ss:$8 sm:$0xf]
    %v49 = vlaneseq
    %v50 = vshrl.u32 %v49, 7
    %v51 = vsub.s32 0, %v50
    %v52 = vrot.slane %v47, %v51
    %v53 = vlaneseq
    %v54 = vshrl.u32 %v53, 7
    %v55 = vsub.s32 1, %v54
    %v56 = vrot.slane %v47, %v55
    %v57 = vlaneseq
    %v58 = vshrl.u32 %v57, 7
    %v59 = vsub.s32 2, %v58
    %v60 = vrot.slane %v47, %v59
    %v61 = vlaneseq
    %v62 = vshrl.u32 %v61, 7
    %v63 = vsub.s32 3, %v62
    %v64 = vrot.slane %v47, %v63
    %v69 = vmul.f32 %v46, %v52
    %v70 = vmul.f32 %v45, %v56
    %v71 = vmul.f32 %v44, %v60
    %v72 = vmul.f32 %v43, %v64
    %v73 = vld [vmem:[%s1] sm:$0xff]
    %vm74 = vcmask 31744
    %v76 = vsel %vm74, %v73, 0
    %vm78 = vcmask 1043456
    %v80 = vsel %vm78, %v69, 0
    %v83 = vsel %vm78, %v70, 0
    %v86 = vsel %vm78, %v71, 0
    %v89 = vsel %vm78, %v72, 0
    %91 = vmatprep.subr.mxu0 %v83
    %92 = vmatpush1.msra.mxu0 %v80
    %93 = vmatprep.subr.mxu0 0.0
    %94 = vmatpush1.msra.mxu0 0.0
    %95 = vmatprep.subr.mxu0 0.0
    %96 = vmatpush1.msra.mxu0 0.0
    %97 = vmatprep.subr.mxu0 0.0
    %98 = vmatpush1.msra.mxu0 0.0
    %99 = vmatprep.subr.mxu0 0.0
    %100 = vmatpush1.msra.mxu0 0.0
    %101 = vmatprep.subr.mxu0 0.0
    %102 = vmatpush1.msra.mxu0 0.0
    %103 = vmatprep.subr.mxu0 0.0
    %104 = vmatpush1.msra.mxu0 0.0
    %105 = vmatprep.subr.mxu0 0.0
    %106 = vmatpush1.msra.mxu0 0.0
    %107 = vmatprep.subr.mxu0 0.0
    %108 = vmatpush1.msra.mxu0 0.0
    %109 = vmatprep.subr.mxu0 0.0
    %110 = vmatpush1.msra.mxu0 0.0
    %111 = vmatprep.subr.mxu0 0.0
    %112 = vmatpush1.msra.mxu0 0.0
    %113 = vmatprep.subr.mxu0 0.0
    %114 = vmatpush1.msra.mxu0 0.0
    %115 = vmatprep.subr.mxu0 0.0
    %116 = vmatpush1.msra.mxu0 0.0
    %117 = vmatprep.subr.mxu0 0.0
    %118 = vmatpush1.msra.mxu0 0.0
    %119 = vmatprep.subr.mxu0 0.0
    %120 = vmatpush1.msra.mxu0 0.0
    %121 = vmatprep.subr.mxu0 0.0
    %122 = vmatpush1.msra.mxu0 0.0
    %123 = vmatprep.subr.mxu0 0.0
    %124 = vmatpush1.msra.mxu0 0.0
    %125 = vmatprep.subr.mxu0 0.0
    %126 = vmatpush1.msra.mxu0 0.0
    %127 = vmatprep.subr.mxu0 0.0
    %128 = vmatpush1.msra.mxu0 0.0
    %129 = vmatprep.subr.mxu0 0.0
    %130 = vmatpush1.msra.mxu0 0.0
    %131 = vmatprep.subr.mxu0 0.0
    %132 = vmatpush1.msra.mxu0 0.0
    %133 = vmatprep.subr.mxu0 0.0
    %134 = vmatpush1.msra.mxu0 0.0
    %135 = vmatprep.subr.mxu0 0.0
    %136 = vmatpush1.msra.mxu0 0.0
    %137 = vmatprep.subr.mxu0 0.0
    %138 = vmatpush1.msra.mxu0 0.0
    %139 = vmatprep.subr.mxu0 0.0
    %140 = vmatpush1.msra.mxu0 0.0
    %141 = vmatprep.subr.mxu0 0.0
    %142 = vmatpush1.msra.mxu0 0.0
    %143 = vmatprep.subr.mxu0 0.0
    %144 = vmatpush1.msra.mxu0 0.0
    %145 = vmatprep.subr.mxu0 0.0
    %146 = vmatpush1.msra.mxu0 0.0
    %147 = vmatprep.subr.mxu0 0.0
    %148 = vmatpush1.msra.mxu0 0.0
    %149 = vmatprep.subr.mxu0 0.0
    %150 = vmatpush1.msra.mxu0 0.0
    %151 = vmatprep.subr.mxu0 0.0
    %152 = vmatpush1.msra.mxu0 0.0
    %153 = vmatprep.subr.mxu0 0.0
    %154 = vmatpush1.msra.mxu0 0.0
    %155 = vmatprep.mubr.f32.mxu0 0.0
    %156 = vmatmul.mubr.f32.gmra.mrb[0].mxu0 %v76
    %v157 = vpop.f32.mrb[0].mxu0
    %v158 = vadd.f32 0.0, %v157
    %v159 = vpop.f32.mrb[0].mxu0
    %v160 = vadd.f32 0.0, %v159
    %161 = vdwg.mxu0
    %162 = vmatprep.subr.mxu0 %v89
    %163 = vmatpush1.msra.mxu0 %v86
    %164 = vmatprep.subr.mxu0 0.0
    %165 = vmatpush1.msra.mxu0 0.0
    %166 = vmatprep.subr.mxu0 0.0
    %167 = vmatpush1.msra.mxu0 0.0
    %168 = vmatprep.subr.mxu0 0.0
    %169 = vmatpush1.msra.mxu0 0.0
    %170 = vmatprep.subr.mxu0 0.0
    %171 = vmatpush1.msra.mxu0 0.0
    %172 = vmatprep.subr.mxu0 0.0
    %173 = vmatpush1.msra.mxu0 0.0
    %174 = vmatprep.subr.mxu0 0.0
    %175 = vmatpush1.msra.mxu0 0.0
    %176 = vmatprep.subr.mxu0 0.0
    %177 = vmatpush1.msra.mxu0 0.0
    %178 = vmatprep.subr.mxu0 0.0
    %179 = vmatpush1.msra.mxu0 0.0
    %180 = vmatprep.subr.mxu0 0.0
    %181 = vmatpush1.msra.mxu0 0.0
    %182 = vmatprep.subr.mxu0 0.0
    %183 = vmatpush1.msra.mxu0 0.0
    %184 = vmatprep.subr.mxu0 0.0
    %185 = vmatpush1.msra.mxu0 0.0
    %186 = vmatprep.subr.mxu0 0.0
    %187 = vmatpush1.msra.mxu0 0.0
    %188 = vmatprep.subr.mxu0 0.0
    %189 = vmatpush1.msra.mxu0 0.0
    %190 = vmatprep.subr.mxu0 0.0
    %191 = vmatpush1.msra.mxu0 0.0
    %192 = vmatprep.subr.mxu0 0.0
    %193 = vmatpush1.msra.mxu0 0.0
    %194 = vmatprep.subr.mxu0 0.0
    %195 = vmatpush1.msra.mxu0 0.0
    %196 = vmatprep.subr.mxu0 0.0
    %197 = vmatpush1.msra.mxu0 0.0
    %198 = vmatprep.subr.mxu0 0.0
    %199 = vmatpush1.msra.mxu0 0.0
    %200 = vmatprep.subr.mxu0 0.0
    %201 = vmatpush1.msra.mxu0 0.0
    %202 = vmatprep.subr.mxu0 0.0
    %203 = vmatpush1.msra.mxu0 0.0
    %204 = vmatprep.subr.mxu0 0.0
    %205 = vmatpush1.msra.mxu0 0.0
    %206 = vmatprep.subr.mxu0 0.0
    %207 = vmatpush1.msra.mxu0 0.0
    %208 = vmatprep.subr.mxu0 0.0
    %209 = vmatpush1.msra.mxu0 0.0
    %210 = vmatprep.subr.mxu0 0.0
    %211 = vmatpush1.msra.mxu0 0.0
    %212 = vmatprep.subr.mxu0 0.0
    %213 = vmatpush1.msra.mxu0 0.0
    %214 = vmatprep.subr.mxu0 0.0
    %215 = vmatpush1.msra.mxu0 0.0
    %216 = vmatprep.subr.mxu0 0.0
    %217 = vmatpush1.msra.mxu0 0.0
    %218 = vmatprep.subr.mxu0 0.0
    %219 = vmatpush1.msra.mxu0 0.0
    %220 = vmatprep.subr.mxu0 0.0
    %221 = vmatpush1.msra.mxu0 0.0
    %222 = vmatprep.subr.mxu0 0.0
    %223 = vmatpush1.msra.mxu0 0.0
    %224 = vmatprep.subr.mxu0 0.0
    %225 = vmatpush1.msra.mxu0 0.0
    %226 = vmatprep.mubr.f32.mxu0 0.0
    %227 = vmatmul.mubr.f32.gmra.mrb[0].mxu0 %v76
    %v228 = vpop.f32.mrb[0].mxu0
    %v229 = vadd.f32 0.0, %v228
    %v230 = vpop.f32.mrb[0].mxu0
    %v231 = vadd.f32 0.0, %v230
    %232 = vdwg.mxu0
    %v233 = vadd.f32 %v24, %v158
    %v234 = vadd.f32 %v24, %v160
    %v235 = vadd.f32 %v24, %v229
    %v236 = vadd.f32 %v24, %v231
    %237 = vrot.lane.b32.xlu0 %v18, 16
    %v238 = vpop.permute.xlu0 %237
    %239 = vrot.lane.b32.xlu0 %v28, 16
    %v240 = vpop.permute.xlu0 %239
    %241 = vrot.lane.b32.xlu0 %v19, 16
    %v242 = vpop.permute.xlu0 %241
    %243 = vrot.lane.b32.xlu0 %v29, 16
    %v244 = vpop.permute.xlu0 %243
    %vm245 = vcmp.lt.s32.totalorder %v41, 16
    %v246 = vsel %vm245, %v242, %v244
    %v247 = vsel %vm245, %v240, %v242
    %v248 = vsel %vm245, %v238, %v240
    %v249 = vsel %vm245, %v244, %v238
    %s250 = scalar_lea.vmem %s3, 1
    %v251 = vld [vmem:[%s250] ss:$8 sm:$0xf]
    %v253 = vlaneseq
    %v254 = vshrl.u32 %v253, 7
    %v255 = vsub.s32 0, %v254
    %v256 = vrot.slane %v251, %v255
    %v257 = vlaneseq
    %v258 = vshrl.u32 %v257, 7
    %v259 = vsub.s32 1, %v258
    %v260 = vrot.slane %v251, %v259
    %v261 = vlaneseq
    %v262 = vshrl.u32 %v261, 7
    %v263 = vsub.s32 2, %v262
    %v264 = vrot.slane %v251, %v263
    %v265 = vlaneseq
    %v266 = vshrl.u32 %v265, 7
    %v267 = vsub.s32 3, %v266
    %v268 = vrot.slane %v251, %v267
    %v273 = vmul.f32 %v249, %v256
    %v274 = vmul.f32 %v248, %v260
    %v275 = vmul.f32 %v247, %v264
    %v276 = vmul.f32 %v246, %v268
    %s277 = scalar_lea.vmem %s1, 8
    %v278 = vld [vmem:[%s277] sm:$0xff]
    %v280 = vsel %vm74, %v278, 0
    %v283 = vsel %vm78, %v273, 0
    %v286 = vsel %vm78, %v274, 0
    %v289 = vsel %vm78, %v275, 0
    %v292 = vsel %vm78, %v276, 0
    %294 = vmatprep.subr.mxu0 %v286
    %295 = vmatpush1.msra.mxu0 %v283
    %296 = vmatprep.subr.mxu0 0.0
    %297 = vmatpush1.msra.mxu0 0.0
    %298 = vmatprep.subr.mxu0 0.0
    %299 = vmatpush1.msra.mxu0 0.0
    %300 = vmatprep.subr.mxu0 0.0
    %301 = vmatpush1.msra.mxu0 0.0
    %302 = vmatprep.subr.mxu0 0.0
    %303 = vmatpush1.msra.mxu0 0.0
    %304 = vmatprep.subr.mxu0 0.0
    %305 = vmatpush1.msra.mxu0 0.0
    %306 = vmatprep.subr.mxu0 0.0
    %307 = vmatpush1.msra.mxu0 0.0
    %308 = vmatprep.subr.mxu0 0.0
    %309 = vmatpush1.msra.mxu0 0.0
    %310 = vmatprep.subr.mxu0 0.0
    %311 = vmatpush1.msra.mxu0 0.0
    %312 = vmatprep.subr.mxu0 0.0
    %313 = vmatpush1.msra.mxu0 0.0
    %314 = vmatprep.subr.mxu0 0.0
    %315 = vmatpush1.msra.mxu0 0.0
    %316 = vmatprep.subr.mxu0 0.0
    %317 = vmatpush1.msra.mxu0 0.0
    %318 = vmatprep.subr.mxu0 0.0
    %319 = vmatpush1.msra.mxu0 0.0
    %320 = vmatprep.subr.mxu0 0.0
    %321 = vmatpush1.msra.mxu0 0.0
    %322 = vmatprep.subr.mxu0 0.0
    %323 = vmatpush1.msra.mxu0 0.0
    %324 = vmatprep.subr.mxu0 0.0
    %325 = vmatpush1.msra.mxu0 0.0
    %326 = vmatprep.subr.mxu0 0.0
    %327 = vmatpush1.msra.mxu0 0.0
    %328 = vmatprep.subr.mxu0 0.0
    %329 = vmatpush1.msra.mxu0 0.0
    %330 = vmatprep.subr.mxu0 0.0
    %331 = vmatpush1.msra.mxu0 0.0
    %332 = vmatprep.subr.mxu0 0.0
    %333 = vmatpush1.msra.mxu0 0.0
    %334 = vmatprep.subr.mxu0 0.0
    %335 = vmatpush1.msra.mxu0 0.0
    %336 = vmatprep.subr.mxu0 0.0
    %337 = vmatpush1.msra.mxu0 0.0
    %338 = vmatprep.subr.mxu0 0.0
    %339 = vmatpush1.msra.mxu0 0.0
    %340 = vmatprep.subr.mxu0 0.0
    %341 = vmatpush1.msra.mxu0 0.0
    %342 = vmatprep.subr.mxu0 0.0
    %343 = vmatpush1.msra.mxu0 0.0
    %344 = vmatprep.subr.mxu0 0.0
    %345 = vmatpush1.msra.mxu0 0.0
    %346 = vmatprep.subr.mxu0 0.0
    %347 = vmatpush1.msra.mxu0 0.0
    %348 = vmatprep.subr.mxu0 0.0
    %349 = vmatpush1.msra.mxu0 0.0
    %350 = vmatprep.subr.mxu0 0.0
    %351 = vmatpush1.msra.mxu0 0.0
    %352 = vmatprep.subr.mxu0 0.0
    %353 = vmatpush1.msra.mxu0 0.0
    %354 = vmatprep.subr.mxu0 0.0
    %355 = vmatpush1.msra.mxu0 0.0
    %356 = vmatprep.subr.mxu0 0.0
    %357 = vmatpush1.msra.mxu0 0.0
    %358 = vmatprep.mubr.f32.mxu0 0.0
    %359 = vmatmul.mubr.f32.gmra.mrb[0].mxu0 %v280
    %v360 = vpop.f32.mrb[0].mxu0
    %v361 = vadd.f32 0.0, %v360
    %v362 = vpop.f32.mrb[0].mxu0
    %v363 = vadd.f32 0.0, %v362
    %364 = vdwg.mxu0
    %365 = vmatprep.subr.mxu0 %v292
    %366 = vmatpush1.msra.mxu0 %v289
    %367 = vmatprep.subr.mxu0 0.0
    %368 = vmatpush1.msra.mxu0 0.0
    %369 = vmatprep.subr.mxu0 0.0
    %370 = vmatpush1.msra.mxu0 0.0
    %371 = vmatprep.subr.mxu0 0.0
    %372 = vmatpush1.msra.mxu0 0.0
    %373 = vmatprep.subr.mxu0 0.0
    %374 = vmatpush1.msra.mxu0 0.0
    %375 = vmatprep.subr.mxu0 0.0
    %376 = vmatpush1.msra.mxu0 0.0
    %377 = vmatprep.subr.mxu0 0.0
    %378 = vmatpush1.msra.mxu0 0.0
    %379 = vmatprep.subr.mxu0 0.0
    %380 = vmatpush1.msra.mxu0 0.0
    %381 = vmatprep.subr.mxu0 0.0
    %382 = vmatpush1.msra.mxu0 0.0
    %383 = vmatprep.subr.mxu0 0.0
    %384 = vmatpush1.msra.mxu0 0.0
    %385 = vmatprep.subr.mxu0 0.0
    %386 = vmatpush1.msra.mxu0 0.0
    %387 = vmatprep.subr.mxu0 0.0
    %388 = vmatpush1.msra.mxu0 0.0
    %389 = vmatprep.subr.mxu0 0.0
    %390 = vmatpush1.msra.mxu0 0.0
    %391 = vmatprep.subr.mxu0 0.0
    %392 = vmatpush1.msra.mxu0 0.0
    %393 = vmatprep.subr.mxu0 0.0
    %394 = vmatpush1.msra.mxu0 0.0
    %395 = vmatprep.subr.mxu0 0.0
    %396 = vmatpush1.msra.mxu0 0.0
    %397 = vmatprep.subr.mxu0 0.0
    %398 = vmatpush1.msra.mxu0 0.0
    %399 = vmatprep.subr.mxu0 0.0
    %400 = vmatpush1.msra.mxu0 0.0
    %401 = vmatprep.subr.mxu0 0.0
    %402 = vmatpush1.msra.mxu0 0.0
    %403 = vmatprep.subr.mxu0 0.0
    %404 = vmatpush1.msra.mxu0 0.0
    %405 = vmatprep.subr.mxu0 0.0
    %406 = vmatpush1.msra.mxu0 0.0
    %407 = vmatprep.subr.mxu0 0.0
    %408 = vmatpush1.msra.mxu0 0.0
    %409 = vmatprep.subr.mxu0 0.0
    %410 = vmatpush1.msra.mxu0 0.0
    %411 = vmatprep.subr.mxu0 0.0
    %412 = vmatpush1.msra.mxu0 0.0
    %413 = vmatprep.subr.mxu0 0.0
    %414 = vmatpush1.msra.mxu0 0.0
    %415 = vmatprep.subr.mxu0 0.0
    %416 = vmatpush1.msra.mxu0 0.0
    %417 = vmatprep.subr.mxu0 0.0
    %418 = vmatpush1.msra.mxu0 0.0
    %419 = vmatprep.subr.mxu0 0.0
    %420 = vmatpush1.msra.mxu0 0.0
    %421 = vmatprep.subr.mxu0 0.0
    %422 = vmatpush1.msra.mxu0 0.0
    %423 = vmatprep.subr.mxu0 0.0
    %424 = vmatpush1.msra.mxu0 0.0
    %425 = vmatprep.subr.mxu0 0.0
    %426 = vmatpush1.msra.mxu0 0.0
    %427 = vmatprep.subr.mxu0 0.0
    %428 = vmatpush1.msra.mxu0 0.0
    %429 = vmatprep.mubr.f32.mxu0 0.0
    %430 = vmatmul.mubr.f32.gmra.mrb[0].mxu0 %v280
    %v431 = vpop.f32.mrb[0].mxu0
    %v432 = vadd.f32 0.0, %v431
    %v433 = vpop.f32.mrb[0].mxu0
    %v434 = vadd.f32 0.0, %v433
    %435 = vdwg.mxu0
    %v436 = vadd.f32 %v233, %v361
    %v437 = vadd.f32 %v234, %v363
    %v438 = vadd.f32 %v235, %v432
    %v439 = vadd.f32 %v236, %v434
    %440 = vrot.lane.b32.xlu0 %v18, 15
    %v441 = vpop.permute.xlu0 %440
    %442 = vrot.lane.b32.xlu0 %v28, 15
    %v443 = vpop.permute.xlu0 %442
    %444 = vrot.lane.b32.xlu0 %v19, 15
    %v445 = vpop.permute.xlu0 %444
    %446 = vrot.lane.b32.xlu0 %v29, 15
    %v447 = vpop.permute.xlu0 %446
    %vm448 = vcmp.lt.s32.totalorder %v41, 15
    %v449 = vsel %vm448, %v445, %v447
    %v450 = vsel %vm448, %v443, %v445
    %v451 = vsel %vm448, %v441, %v443
    %v452 = vsel %vm448, %v447, %v441
    %s453 = scalar_lea.vmem %s3, 2
    %v454 = vld [vmem:[%s453] ss:$8 sm:$0xf]
    %v456 = vlaneseq
    %v457 = vshrl.u32 %v456, 7
    %v458 = vsub.s32 0, %v457
    %v459 = vrot.slane %v454, %v458
    %v460 = vlaneseq
    %v461 = vshrl.u32 %v460, 7
    %v462 = vsub.s32 1, %v461
    %v463 = vrot.slane %v454, %v462
    %v464 = vlaneseq
    %v465 = vshrl.u32 %v464, 7
    %v466 = vsub.s32 2, %v465
    %v467 = vrot.slane %v454, %v466
    %v468 = vlaneseq
    %v469 = vshrl.u32 %v468, 7
    %v470 = vsub.s32 3, %v469
    %v471 = vrot.slane %v454, %v470
    %v476 = vmul.f32 %v452, %v459
    %v477 = vmul.f32 %v451, %v463
    %v478 = vmul.f32 %v450, %v467
    %v479 = vmul.f32 %v449, %v471
    %s480 = scalar_lea.vmem %s1, 16
    %v481 = vld [vmem:[%s480] sm:$0xff]
    %v483 = vsel %vm74, %v481, 0
    %v486 = vsel %vm78, %v476, 0
    %v489 = vsel %vm78, %v477, 0
    %v492 = vsel %vm78, %v478, 0
    %v495 = vsel %vm78, %v479, 0
    %497 = vmatprep.subr.mxu0 %v489
    %498 = vmatpush1.msra.mxu0 %v486
    %499 = vmatprep.subr.mxu0 0.0
    %500 = vmatpush1.msra.mxu0 0.0
    %501 = vmatprep.subr.mxu0 0.0
    %502 = vmatpush1.msra.mxu0 0.0
    %503 = vmatprep.subr.mxu0 0.0
    %504 = vmatpush1.msra.mxu0 0.0
    %505 = vmatprep.subr.mxu0 0.0
    %506 = vmatpush1.msra.mxu0 0.0
    %507 = vmatprep.subr.mxu0 0.0
    %508 = vmatpush1.msra.mxu0 0.0
    %509 = vmatprep.subr.mxu0 0.0
    %510 = vmatpush1.msra.mxu0 0.0
    %511 = vmatprep.subr.mxu0 0.0
    %512 = vmatpush1.msra.mxu0 0.0
    %513 = vmatprep.subr.mxu0 0.0
    %514 = vmatpush1.msra.mxu0 0.0
    %515 = vmatprep.subr.mxu0 0.0
    %516 = vmatpush1.msra.mxu0 0.0
    %517 = vmatprep.subr.mxu0 0.0
    %518 = vmatpush1.msra.mxu0 0.0
    %519 = vmatprep.subr.mxu0 0.0
    %520 = vmatpush1.msra.mxu0 0.0
    %521 = vmatprep.subr.mxu0 0.0
    %522 = vmatpush1.msra.mxu0 0.0
    %523 = vmatprep.subr.mxu0 0.0
    %524 = vmatpush1.msra.mxu0 0.0
    %525 = vmatprep.subr.mxu0 0.0
    %526 = vmatpush1.msra.mxu0 0.0
    %527 = vmatprep.subr.mxu0 0.0
    %528 = vmatpush1.msra.mxu0 0.0
    %529 = vmatprep.subr.mxu0 0.0
    %530 = vmatpush1.msra.mxu0 0.0
    %531 = vmatprep.subr.mxu0 0.0
    %532 = vmatpush1.msra.mxu0 0.0
    %533 = vmatprep.subr.mxu0 0.0
    %534 = vmatpush1.msra.mxu0 0.0
    %535 = vmatprep.subr.mxu0 0.0
    %536 = vmatpush1.msra.mxu0 0.0
    %537 = vmatprep.subr.mxu0 0.0
    %538 = vmatpush1.msra.mxu0 0.0
    %539 = vmatprep.subr.mxu0 0.0
    %540 = vmatpush1.msra.mxu0 0.0
    %541 = vmatprep.subr.mxu0 0.0
    %542 = vmatpush1.msra.mxu0 0.0
    %543 = vmatprep.subr.mxu0 0.0
    %544 = vmatpush1.msra.mxu0 0.0
    %545 = vmatprep.subr.mxu0 0.0
    %546 = vmatpush1.msra.mxu0 0.0
    %547 = vmatprep.subr.mxu0 0.0
    %548 = vmatpush1.msra.mxu0 0.0
    %549 = vmatprep.subr.mxu0 0.0
    %550 = vmatpush1.msra.mxu0 0.0
    %551 = vmatprep.subr.mxu0 0.0
    %552 = vmatpush1.msra.mxu0 0.0
    %553 = vmatprep.subr.mxu0 0.0
    %554 = vmatpush1.msra.mxu0 0.0
    %555 = vmatprep.subr.mxu0 0.0
    %556 = vmatpush1.msra.mxu0 0.0
    %557 = vmatprep.subr.mxu0 0.0
    %558 = vmatpush1.msra.mxu0 0.0
    %559 = vmatprep.subr.mxu0 0.0
    %560 = vmatpush1.msra.mxu0 0.0
    %561 = vmatprep.mubr.f32.mxu0 0.0
    %562 = vmatmul.mubr.f32.gmra.mrb[0].mxu0 %v483
    %v563 = vpop.f32.mrb[0].mxu0
    %v564 = vadd.f32 0.0, %v563
    %v565 = vpop.f32.mrb[0].mxu0
    %v566 = vadd.f32 0.0, %v565
    %567 = vdwg.mxu0
    %568 = vmatprep.subr.mxu0 %v495
    %569 = vmatpush1.msra.mxu0 %v492
    %570 = vmatprep.subr.mxu0 0.0
    %571 = vmatpush1.msra.mxu0 0.0
    %572 = vmatprep.subr.mxu0 0.0
    %573 = vmatpush1.msra.mxu0 0.0
    %574 = vmatprep.subr.mxu0 0.0
    %575 = vmatpush1.msra.mxu0 0.0
    %576 = vmatprep.subr.mxu0 0.0
    %577 = vmatpush1.msra.mxu0 0.0
    %578 = vmatprep.subr.mxu0 0.0
    %579 = vmatpush1.msra.mxu0 0.0
    %580 = vmatprep.subr.mxu0 0.0
    %581 = vmatpush1.msra.mxu0 0.0
    %582 = vmatprep.subr.mxu0 0.0
    %583 = vmatpush1.msra.mxu0 0.0
    %584 = vmatprep.subr.mxu0 0.0
    %585 = vmatpush1.msra.mxu0 0.0
    %586 = vmatprep.subr.mxu0 0.0
    %587 = vmatpush1.msra.mxu0 0.0
    %588 = vmatprep.subr.mxu0 0.0
    %589 = vmatpush1.msra.mxu0 0.0
    %590 = vmatprep.subr.mxu0 0.0
    %591 = vmatpush1.msra.mxu0 0.0
    %592 = vmatprep.subr.mxu0 0.0
    %593 = vmatpush1.msra.mxu0 0.0
    %594 = vmatprep.subr.mxu0 0.0
    %595 = vmatpush1.msra.mxu0 0.0
    %596 = vmatprep.subr.mxu0 0.0
    %597 = vmatpush1.msra.mxu0 0.0
    %598 = vmatprep.subr.mxu0 0.0
    %599 = vmatpush1.msra.mxu0 0.0
    %600 = vmatprep.subr.mxu0 0.0
    %601 = vmatpush1.msra.mxu0 0.0
    %602 = vmatprep.subr.mxu0 0.0
    %603 = vmatpush1.msra.mxu0 0.0
    %604 = vmatprep.subr.mxu0 0.0
    %605 = vmatpush1.msra.mxu0 0.0
    %606 = vmatprep.subr.mxu0 0.0
    %607 = vmatpush1.msra.mxu0 0.0
    %608 = vmatprep.subr.mxu0 0.0
    %609 = vmatpush1.msra.mxu0 0.0
    %610 = vmatprep.subr.mxu0 0.0
    %611 = vmatpush1.msra.mxu0 0.0
    %612 = vmatprep.subr.mxu0 0.0
    %613 = vmatpush1.msra.mxu0 0.0
    %614 = vmatprep.subr.mxu0 0.0
    %615 = vmatpush1.msra.mxu0 0.0
    %616 = vmatprep.subr.mxu0 0.0
    %617 = vmatpush1.msra.mxu0 0.0
    %618 = vmatprep.subr.mxu0 0.0
    %619 = vmatpush1.msra.mxu0 0.0
    %620 = vmatprep.subr.mxu0 0.0
    %621 = vmatpush1.msra.mxu0 0.0
    %622 = vmatprep.subr.mxu0 0.0
    %623 = vmatpush1.msra.mxu0 0.0
    %624 = vmatprep.subr.mxu0 0.0
    %625 = vmatpush1.msra.mxu0 0.0
    %626 = vmatprep.subr.mxu0 0.0
    %627 = vmatpush1.msra.mxu0 0.0
    %628 = vmatprep.subr.mxu0 0.0
    %629 = vmatpush1.msra.mxu0 0.0
    %630 = vmatprep.subr.mxu0 0.0
    %631 = vmatpush1.msra.mxu0 0.0
    %632 = vmatprep.mubr.f32.mxu0 0.0
    %633 = vmatmul.mubr.f32.gmra.mrb[0].mxu0 %v483
    %v634 = vpop.f32.mrb[0].mxu0
    %v635 = vadd.f32 0.0, %v634
    %v636 = vpop.f32.mrb[0].mxu0
    %v637 = vadd.f32 0.0, %v636
    %638 = vdwg.mxu0
    %v639 = vadd.f32 %v436, %v564
    %v640 = vadd.f32 %v437, %v566
    %v641 = vadd.f32 %v438, %v635
    %v642 = vadd.f32 %v439, %v637
    %643 = vrot.lane.b32.xlu0 %v18, 1
    %v644 = vpop.permute.xlu0 %643
    %645 = vrot.lane.b32.xlu0 %v28, 1
    %v646 = vpop.permute.xlu0 %645
    %647 = vrot.lane.b32.xlu0 %v19, 1
    %v648 = vpop.permute.xlu0 %647
    %649 = vrot.lane.b32.xlu0 %v29, 1
    %v650 = vpop.permute.xlu0 %649
    %vm651 = vcmp.lt.s32.totalorder %v41, 1
    %v652 = vsel %vm651, %v648, %v650
    %v653 = vsel %vm651, %v646, %v648
    %v654 = vsel %vm651, %v644, %v646
    %v655 = vsel %vm651, %v650, %v644
    %s656 = scalar_lea.vmem %s3, 3
    %v657 = vld [vmem:[%s656] ss:$8 sm:$0xf]
    %v659 = vlaneseq
    %v660 = vshrl.u32 %v659, 7
    %v661 = vsub.s32 0, %v660
    %v662 = vrot.slane %v657, %v661
    %v663 = vlaneseq
    %v664 = vshrl.u32 %v663, 7
    %v665 = vsub.s32 1, %v664
    %v666 = vrot.slane %v657, %v665
    %v667 = vlaneseq
    %v668 = vshrl.u32 %v667, 7
    %v669 = vsub.s32 2, %v668
    %v670 = vrot.slane %v657, %v669
    %v671 = vlaneseq
    %v672 = vshrl.u32 %v671, 7
    %v673 = vsub.s32 3, %v672
    %v674 = vrot.slane %v657, %v673
    %v679 = vmul.f32 %v655, %v662
    %v680 = vmul.f32 %v654, %v666
    %v681 = vmul.f32 %v653, %v670
    %v682 = vmul.f32 %v652, %v674
    %s683 = scalar_lea.vmem %s1, 24
    %v684 = vld [vmem:[%s683] sm:$0xff]
    %v686 = vsel %vm74, %v684, 0
    %v689 = vsel %vm78, %v679, 0
    %v692 = vsel %vm78, %v680, 0
    %v695 = vsel %vm78, %v681, 0
    %v698 = vsel %vm78, %v682, 0
    %700 = vmatprep.subr.mxu0 %v692
    %701 = vmatpush1.msra.mxu0 %v689
    %702 = vmatprep.subr.mxu0 0.0
    %703 = vmatpush1.msra.mxu0 0.0
    %704 = vmatprep.subr.mxu0 0.0
    %705 = vmatpush1.msra.mxu0 0.0
    %706 = vmatprep.subr.mxu0 0.0
    %707 = vmatpush1.msra.mxu0 0.0
    %708 = vmatprep.subr.mxu0 0.0
    %709 = vmatpush1.msra.mxu0 0.0
    %710 = vmatprep.subr.mxu0 0.0
    %711 = vmatpush1.msra.mxu0 0.0
    %712 = vmatprep.subr.mxu0 0.0
    %713 = vmatpush1.msra.mxu0 0.0
    %714 = vmatprep.subr.mxu0 0.0
    %715 = vmatpush1.msra.mxu0 0.0
    %716 = vmatprep.subr.mxu0 0.0
    %717 = vmatpush1.msra.mxu0 0.0
    %718 = vmatprep.subr.mxu0 0.0
    %719 = vmatpush1.msra.mxu0 0.0
    %720 = vmatprep.subr.mxu0 0.0
    %721 = vmatpush1.msra.mxu0 0.0
    %722 = vmatprep.subr.mxu0 0.0
    %723 = vmatpush1.msra.mxu0 0.0
    %724 = vmatprep.subr.mxu0 0.0
    %725 = vmatpush1.msra.mxu0 0.0
    %726 = vmatprep.subr.mxu0 0.0
    %727 = vmatpush1.msra.mxu0 0.0
    %728 = vmatprep.subr.mxu0 0.0
    %729 = vmatpush1.msra.mxu0 0.0
    %730 = vmatprep.subr.mxu0 0.0
    %731 = vmatpush1.msra.mxu0 0.0
    %732 = vmatprep.subr.mxu0 0.0
    %733 = vmatpush1.msra.mxu0 0.0
    %734 = vmatprep.subr.mxu0 0.0
    %735 = vmatpush1.msra.mxu0 0.0
    %736 = vmatprep.subr.mxu0 0.0
    %737 = vmatpush1.msra.mxu0 0.0
    %738 = vmatprep.subr.mxu0 0.0
    %739 = vmatpush1.msra.mxu0 0.0
    %740 = vmatprep.subr.mxu0 0.0
    %741 = vmatpush1.msra.mxu0 0.0
    %742 = vmatprep.subr.mxu0 0.0
    %743 = vmatpush1.msra.mxu0 0.0
    %744 = vmatprep.subr.mxu0 0.0
    %745 = vmatpush1.msra.mxu0 0.0
    %746 = vmatprep.subr.mxu0 0.0
    %747 = vmatpush1.msra.mxu0 0.0
    %748 = vmatprep.subr.mxu0 0.0
    %749 = vmatpush1.msra.mxu0 0.0
    %750 = vmatprep.subr.mxu0 0.0
    %751 = vmatpush1.msra.mxu0 0.0
    %752 = vmatprep.subr.mxu0 0.0
    %753 = vmatpush1.msra.mxu0 0.0
    %754 = vmatprep.subr.mxu0 0.0
    %755 = vmatpush1.msra.mxu0 0.0
    %756 = vmatprep.subr.mxu0 0.0
    %757 = vmatpush1.msra.mxu0 0.0
    %758 = vmatprep.subr.mxu0 0.0
    %759 = vmatpush1.msra.mxu0 0.0
    %760 = vmatprep.subr.mxu0 0.0
    %761 = vmatpush1.msra.mxu0 0.0
    %762 = vmatprep.subr.mxu0 0.0
    %763 = vmatpush1.msra.mxu0 0.0
    %764 = vmatprep.mubr.f32.mxu0 0.0
    %765 = vmatmul.mubr.f32.gmra.mrb[0].mxu0 %v686
    %v766 = vpop.f32.mrb[0].mxu0
    %v767 = vadd.f32 0.0, %v766
    %v768 = vpop.f32.mrb[0].mxu0
    %v769 = vadd.f32 0.0, %v768
    %770 = vdwg.mxu0
    %771 = vmatprep.subr.mxu0 %v698
    %772 = vmatpush1.msra.mxu0 %v695
    %773 = vmatprep.subr.mxu0 0.0
    %774 = vmatpush1.msra.mxu0 0.0
    %775 = vmatprep.subr.mxu0 0.0
    %776 = vmatpush1.msra.mxu0 0.0
    %777 = vmatprep.subr.mxu0 0.0
    %778 = vmatpush1.msra.mxu0 0.0
    %779 = vmatprep.subr.mxu0 0.0
    %780 = vmatpush1.msra.mxu0 0.0
    %781 = vmatprep.subr.mxu0 0.0
    %782 = vmatpush1.msra.mxu0 0.0
    %783 = vmatprep.subr.mxu0 0.0
    %784 = vmatpush1.msra.mxu0 0.0
    %785 = vmatprep.subr.mxu0 0.0
    %786 = vmatpush1.msra.mxu0 0.0
    %787 = vmatprep.subr.mxu0 0.0
    %788 = vmatpush1.msra.mxu0 0.0
    %789 = vmatprep.subr.mxu0 0.0
    %790 = vmatpush1.msra.mxu0 0.0
    %791 = vmatprep.subr.mxu0 0.0
    %792 = vmatpush1.msra.mxu0 0.0
    %793 = vmatprep.subr.mxu0 0.0
    %794 = vmatpush1.msra.mxu0 0.0
    %795 = vmatprep.subr.mxu0 0.0
    %796 = vmatpush1.msra.mxu0 0.0
    %797 = vmatprep.subr.mxu0 0.0
    %798 = vmatpush1.msra.mxu0 0.0
    %799 = vmatprep.subr.mxu0 0.0
    %800 = vmatpush1.msra.mxu0 0.0
    %801 = vmatprep.subr.mxu0 0.0
    %802 = vmatpush1.msra.mxu0 0.0
    %803 = vmatprep.subr.mxu0 0.0
    %804 = vmatpush1.msra.mxu0 0.0
    %805 = vmatprep.subr.mxu0 0.0
    %806 = vmatpush1.msra.mxu0 0.0
    %807 = vmatprep.subr.mxu0 0.0
    %808 = vmatpush1.msra.mxu0 0.0
    %809 = vmatprep.subr.mxu0 0.0
    %810 = vmatpush1.msra.mxu0 0.0
    %811 = vmatprep.subr.mxu0 0.0
    %812 = vmatpush1.msra.mxu0 0.0
    %813 = vmatprep.subr.mxu0 0.0
    %814 = vmatpush1.msra.mxu0 0.0
    %815 = vmatprep.subr.mxu0 0.0
    %816 = vmatpush1.msra.mxu0 0.0
    %817 = vmatprep.subr.mxu0 0.0
    %818 = vmatpush1.msra.mxu0 0.0
    %819 = vmatprep.subr.mxu0 0.0
    %820 = vmatpush1.msra.mxu0 0.0
    %821 = vmatprep.subr.mxu0 0.0
    %822 = vmatpush1.msra.mxu0 0.0
    %823 = vmatprep.subr.mxu0 0.0
    %824 = vmatpush1.msra.mxu0 0.0
    %825 = vmatprep.subr.mxu0 0.0
    %826 = vmatpush1.msra.mxu0 0.0
    %827 = vmatprep.subr.mxu0 0.0
    %828 = vmatpush1.msra.mxu0 0.0
    %829 = vmatprep.subr.mxu0 0.0
    %830 = vmatpush1.msra.mxu0 0.0
    %831 = vmatprep.subr.mxu0 0.0
    %832 = vmatpush1.msra.mxu0 0.0
    %833 = vmatprep.subr.mxu0 0.0
    %834 = vmatpush1.msra.mxu0 0.0
    %835 = vmatprep.mubr.f32.mxu0 0.0
    %836 = vmatmul.mubr.f32.gmra.mrb[0].mxu0 %v686
    %v837 = vpop.f32.mrb[0].mxu0
    %v838 = vadd.f32 0.0, %v837
    %v839 = vpop.f32.mrb[0].mxu0
    %v840 = vadd.f32 0.0, %v839
    %841 = vdwg.mxu0
    %v842 = vadd.f32 %v639, %v767
    %v843 = vadd.f32 %v640, %v769
    %v844 = vadd.f32 %v641, %v838
    %v845 = vadd.f32 %v642, %v840
    %s846 = scalar_lea.vmem %s1, 32
    %v847 = vld [vmem:[%s846] sm:$0xff]
    %v849 = vsel %vm74, %v847, 0
    %v851 = vsel %vm78, %v18, 0
    %v853 = vsel %vm78, %v28, 0
    %v855 = vsel %vm78, %v19, 0
    %v857 = vsel %vm78, %v29, 0
    %859 = vmatprep.subr.mxu0 %v853
    %860 = vmatpush1.msra.mxu0 %v851
    %861 = vmatprep.subr.mxu0 0.0
    %862 = vmatpush1.msra.mxu0 0.0
    %863 = vmatprep.subr.mxu0 0.0
    %864 = vmatpush1.msra.mxu0 0.0
    %865 = vmatprep.subr.mxu0 0.0
    %866 = vmatpush1.msra.mxu0 0.0
    %867 = vmatprep.subr.mxu0 0.0
    %868 = vmatpush1.msra.mxu0 0.0
    %869 = vmatprep.subr.mxu0 0.0
    %870 = vmatpush1.msra.mxu0 0.0
    %871 = vmatprep.subr.mxu0 0.0
    %872 = vmatpush1.msra.mxu0 0.0
    %873 = vmatprep.subr.mxu0 0.0
    %874 = vmatpush1.msra.mxu0 0.0
    %875 = vmatprep.subr.mxu0 0.0
    %876 = vmatpush1.msra.mxu0 0.0
    %877 = vmatprep.subr.mxu0 0.0
    %878 = vmatpush1.msra.mxu0 0.0
    %879 = vmatprep.subr.mxu0 0.0
    %880 = vmatpush1.msra.mxu0 0.0
    %881 = vmatprep.subr.mxu0 0.0
    %882 = vmatpush1.msra.mxu0 0.0
    %883 = vmatprep.subr.mxu0 0.0
    %884 = vmatpush1.msra.mxu0 0.0
    %885 = vmatprep.subr.mxu0 0.0
    %886 = vmatpush1.msra.mxu0 0.0
    %887 = vmatprep.subr.mxu0 0.0
    %888 = vmatpush1.msra.mxu0 0.0
    %889 = vmatprep.subr.mxu0 0.0
    %890 = vmatpush1.msra.mxu0 0.0
    %891 = vmatprep.subr.mxu0 0.0
    %892 = vmatpush1.msra.mxu0 0.0
    %893 = vmatprep.subr.mxu0 0.0
    %894 = vmatpush1.msra.mxu0 0.0
    %895 = vmatprep.subr.mxu0 0.0
    %896 = vmatpush1.msra.mxu0 0.0
    %897 = vmatprep.subr.mxu0 0.0
    %898 = vmatpush1.msra.mxu0 0.0
    %899 = vmatprep.subr.mxu0 0.0
    %900 = vmatpush1.msra.mxu0 0.0
    %901 = vmatprep.subr.mxu0 0.0
    %902 = vmatpush1.msra.mxu0 0.0
    %903 = vmatprep.subr.mxu0 0.0
    %904 = vmatpush1.msra.mxu0 0.0
    %905 = vmatprep.subr.mxu0 0.0
    %906 = vmatpush1.msra.mxu0 0.0
    %907 = vmatprep.subr.mxu0 0.0
    %908 = vmatpush1.msra.mxu0 0.0
    %909 = vmatprep.subr.mxu0 0.0
    %910 = vmatpush1.msra.mxu0 0.0
    %911 = vmatprep.subr.mxu0 0.0
    %912 = vmatpush1.msra.mxu0 0.0
    %913 = vmatprep.subr.mxu0 0.0
    %914 = vmatpush1.msra.mxu0 0.0
    %915 = vmatprep.subr.mxu0 0.0
    %916 = vmatpush1.msra.mxu0 0.0
    %917 = vmatprep.subr.mxu0 0.0
    %918 = vmatpush1.msra.mxu0 0.0
    %919 = vmatprep.subr.mxu0 0.0
    %920 = vmatpush1.msra.mxu0 0.0
    %921 = vmatprep.subr.mxu0 0.0
    %922 = vmatpush1.msra.mxu0 0.0
    %923 = vmatprep.mubr.f32.mxu0 0.0
    %924 = vmatmul.mubr.f32.gmra.mrb[0].mxu0 %v849
    %v925 = vpop.f32.mrb[0].mxu0
    %v926 = vadd.f32 0.0, %v925
    %v927 = vpop.f32.mrb[0].mxu0
    %v928 = vadd.f32 0.0, %v927
    %929 = vdwg.mxu0
    %930 = vmatprep.subr.mxu0 %v857
    %931 = vmatpush1.msra.mxu0 %v855
    %932 = vmatprep.subr.mxu0 0.0
    %933 = vmatpush1.msra.mxu0 0.0
    %934 = vmatprep.subr.mxu0 0.0
    %935 = vmatpush1.msra.mxu0 0.0
    %936 = vmatprep.subr.mxu0 0.0
    %937 = vmatpush1.msra.mxu0 0.0
    %938 = vmatprep.subr.mxu0 0.0
    %939 = vmatpush1.msra.mxu0 0.0
    %940 = vmatprep.subr.mxu0 0.0
    %941 = vmatpush1.msra.mxu0 0.0
    %942 = vmatprep.subr.mxu0 0.0
    %943 = vmatpush1.msra.mxu0 0.0
    %944 = vmatprep.subr.mxu0 0.0
    %945 = vmatpush1.msra.mxu0 0.0
    %946 = vmatprep.subr.mxu0 0.0
    %947 = vmatpush1.msra.mxu0 0.0
    %948 = vmatprep.subr.mxu0 0.0
    %949 = vmatpush1.msra.mxu0 0.0
    %950 = vmatprep.subr.mxu0 0.0
    %951 = vmatpush1.msra.mxu0 0.0
    %952 = vmatprep.subr.mxu0 0.0
    %953 = vmatpush1.msra.mxu0 0.0
    %954 = vmatprep.subr.mxu0 0.0
    %955 = vmatpush1.msra.mxu0 0.0
    %956 = vmatprep.subr.mxu0 0.0
    %957 = vmatpush1.msra.mxu0 0.0
    %958 = vmatprep.subr.mxu0 0.0
    %959 = vmatpush1.msra.mxu0 0.0
    %960 = vmatprep.subr.mxu0 0.0
    %961 = vmatpush1.msra.mxu0 0.0
    %962 = vmatprep.subr.mxu0 0.0
    %963 = vmatpush1.msra.mxu0 0.0
    %964 = vmatprep.subr.mxu0 0.0
    %965 = vmatpush1.msra.mxu0 0.0
    %966 = vmatprep.subr.mxu0 0.0
    %967 = vmatpush1.msra.mxu0 0.0
    %968 = vmatprep.subr.mxu0 0.0
    %969 = vmatpush1.msra.mxu0 0.0
    %970 = vmatprep.subr.mxu0 0.0
    %971 = vmatpush1.msra.mxu0 0.0
    %972 = vmatprep.subr.mxu0 0.0
    %973 = vmatpush1.msra.mxu0 0.0
    %974 = vmatprep.subr.mxu0 0.0
    %975 = vmatpush1.msra.mxu0 0.0
    %976 = vmatprep.subr.mxu0 0.0
    %977 = vmatpush1.msra.mxu0 0.0
    %978 = vmatprep.subr.mxu0 0.0
    %979 = vmatpush1.msra.mxu0 0.0
    %980 = vmatprep.subr.mxu0 0.0
    %981 = vmatpush1.msra.mxu0 0.0
    %982 = vmatprep.subr.mxu0 0.0
    %983 = vmatpush1.msra.mxu0 0.0
    %984 = vmatprep.subr.mxu0 0.0
    %985 = vmatpush1.msra.mxu0 0.0
    %986 = vmatprep.subr.mxu0 0.0
    %987 = vmatpush1.msra.mxu0 0.0
    %988 = vmatprep.subr.mxu0 0.0
    %989 = vmatpush1.msra.mxu0 0.0
    %990 = vmatprep.subr.mxu0 0.0
    %991 = vmatpush1.msra.mxu0 0.0
    %992 = vmatprep.subr.mxu0 0.0
    %993 = vmatpush1.msra.mxu0 0.0
    %994 = vmatprep.mubr.f32.mxu0 0.0
    %995 = vmatmul.mubr.f32.gmra.mrb[0].mxu0 %v849
    %v996 = vpop.f32.mrb[0].mxu0
    %v997 = vadd.f32 0.0, %v996
    %v998 = vpop.f32.mrb[0].mxu0
    %v999 = vadd.f32 0.0, %v998
    %1000 = vdwg.mxu0
    %v1001 = vadd.f32 %v842, %v926
    %v1002 = vadd.f32 %v843, %v928
    %v1003 = vadd.f32 %v844, %v997
    %v1004 = vadd.f32 %v845, %v999
    %1005 = vrot.lane.b32.xlu0 %v18, 127
    %v1006 = vpop.permute.xlu0 %1005
    %1007 = vrot.lane.b32.xlu0 %v28, 127
    %v1008 = vpop.permute.xlu0 %1007
    %1009 = vrot.lane.b32.xlu0 %v19, 127
    %v1010 = vpop.permute.xlu0 %1009
    %1011 = vrot.lane.b32.xlu0 %v29, 127
    %v1012 = vpop.permute.xlu0 %1011
    %vm1013 = vcmp.lt.s32.totalorder %v41, 127
    %v1014 = vsel %vm1013, %v1010, %v1012
    %v1015 = vsel %vm1013, %v1008, %v1010
    %v1016 = vsel %vm1013, %v1006, %v1008
    %v1017 = vsel %vm1013, %v1012, %v1006
    %s1018 = scalar_lea.vmem %s3, 4
    %v1019 = vld [vmem:[%s1018] ss:$8 sm:$0xf]
    %v1021 = vlaneseq
    %v1022 = vshrl.u32 %v1021, 7
    %v1023 = vsub.s32 0, %v1022
    %v1024 = vrot.slane %v1019, %v1023
    %v1025 = vlaneseq
    %v1026 = vshrl.u32 %v1025, 7
    %v1027 = vsub.s32 1, %v1026
    %v1028 = vrot.slane %v1019, %v1027
    %v1029 = vlaneseq
    %v1030 = vshrl.u32 %v1029, 7
    %v1031 = vsub.s32 2, %v1030
    %v1032 = vrot.slane %v1019, %v1031
    %v1033 = vlaneseq
    %v1034 = vshrl.u32 %v1033, 7
    %v1035 = vsub.s32 3, %v1034
    %v1036 = vrot.slane %v1019, %v1035
    %v1041 = vmul.f32 %v1016, %v1024
    %v1042 = vmul.f32 %v1015, %v1028
    %v1043 = vmul.f32 %v1014, %v1032
    %v1044 = vmul.f32 %v1017, %v1036
    %s1045 = scalar_lea.vmem %s1, 40
    %v1046 = vld [vmem:[%s1045] sm:$0xff]
    %v1048 = vsel %vm74, %v1046, 0
    %v1051 = vsel %vm78, %v1041, 0
    %v1054 = vsel %vm78, %v1042, 0
    %v1057 = vsel %vm78, %v1043, 0
    %v1060 = vsel %vm78, %v1044, 0
    %1062 = vmatprep.subr.mxu0 %v1054
    %1063 = vmatpush1.msra.mxu0 %v1051
    %1064 = vmatprep.subr.mxu0 0.0
    %1065 = vmatpush1.msra.mxu0 0.0
    %1066 = vmatprep.subr.mxu0 0.0
    %1067 = vmatpush1.msra.mxu0 0.0
    %1068 = vmatprep.subr.mxu0 0.0
    %1069 = vmatpush1.msra.mxu0 0.0
    %1070 = vmatprep.subr.mxu0 0.0
    %1071 = vmatpush1.msra.mxu0 0.0
    %1072 = vmatprep.subr.mxu0 0.0
    %1073 = vmatpush1.msra.mxu0 0.0
    %1074 = vmatprep.subr.mxu0 0.0
    %1075 = vmatpush1.msra.mxu0 0.0
    %1076 = vmatprep.subr.mxu0 0.0
    %1077 = vmatpush1.msra.mxu0 0.0
    %1078 = vmatprep.subr.mxu0 0.0
    %1079 = vmatpush1.msra.mxu0 0.0
    %1080 = vmatprep.subr.mxu0 0.0
    %1081 = vmatpush1.msra.mxu0 0.0
    %1082 = vmatprep.subr.mxu0 0.0
    %1083 = vmatpush1.msra.mxu0 0.0
    %1084 = vmatprep.subr.mxu0 0.0
    %1085 = vmatpush1.msra.mxu0 0.0
    %1086 = vmatprep.subr.mxu0 0.0
    %1087 = vmatpush1.msra.mxu0 0.0
    %1088 = vmatprep.subr.mxu0 0.0
    %1089 = vmatpush1.msra.mxu0 0.0
    %1090 = vmatprep.subr.mxu0 0.0
    %1091 = vmatpush1.msra.mxu0 0.0
    %1092 = vmatprep.subr.mxu0 0.0
    %1093 = vmatpush1.msra.mxu0 0.0
    %1094 = vmatprep.subr.mxu0 0.0
    %1095 = vmatpush1.msra.mxu0 0.0
    %1096 = vmatprep.subr.mxu0 0.0
    %1097 = vmatpush1.msra.mxu0 0.0
    %1098 = vmatprep.subr.mxu0 0.0
    %1099 = vmatpush1.msra.mxu0 0.0
    %1100 = vmatprep.subr.mxu0 0.0
    %1101 = vmatpush1.msra.mxu0 0.0
    %1102 = vmatprep.subr.mxu0 0.0
    %1103 = vmatpush1.msra.mxu0 0.0
    %1104 = vmatprep.subr.mxu0 0.0
    %1105 = vmatpush1.msra.mxu0 0.0
    %1106 = vmatprep.subr.mxu0 0.0
    %1107 = vmatpush1.msra.mxu0 0.0
    %1108 = vmatprep.subr.mxu0 0.0
    %1109 = vmatpush1.msra.mxu0 0.0
    %1110 = vmatprep.subr.mxu0 0.0
    %1111 = vmatpush1.msra.mxu0 0.0
    %1112 = vmatprep.subr.mxu0 0.0
    %1113 = vmatpush1.msra.mxu0 0.0
    %1114 = vmatprep.subr.mxu0 0.0
    %1115 = vmatpush1.msra.mxu0 0.0
    %1116 = vmatprep.subr.mxu0 0.0
    %1117 = vmatpush1.msra.mxu0 0.0
    %1118 = vmatprep.subr.mxu0 0.0
    %1119 = vmatpush1.msra.mxu0 0.0
    %1120 = vmatprep.subr.mxu0 0.0
    %1121 = vmatpush1.msra.mxu0 0.0
    %1122 = vmatprep.subr.mxu0 0.0
    %1123 = vmatpush1.msra.mxu0 0.0
    %1124 = vmatprep.subr.mxu0 0.0
    %1125 = vmatpush1.msra.mxu0 0.0
    %1126 = vmatprep.mubr.f32.mxu0 0.0
    %1127 = vmatmul.mubr.f32.gmra.mrb[0].mxu0 %v1048
    %v1128 = vpop.f32.mrb[0].mxu0
    %v1129 = vadd.f32 0.0, %v1128
    %v1130 = vpop.f32.mrb[0].mxu0
    %v1131 = vadd.f32 0.0, %v1130
    %1132 = vdwg.mxu0
    %1133 = vmatprep.subr.mxu0 %v1060
    %1134 = vmatpush1.msra.mxu0 %v1057
    %1135 = vmatprep.subr.mxu0 0.0
    %1136 = vmatpush1.msra.mxu0 0.0
    %1137 = vmatprep.subr.mxu0 0.0
    %1138 = vmatpush1.msra.mxu0 0.0
    %1139 = vmatprep.subr.mxu0 0.0
    %1140 = vmatpush1.msra.mxu0 0.0
    %1141 = vmatprep.subr.mxu0 0.0
    %1142 = vmatpush1.msra.mxu0 0.0
    %1143 = vmatprep.subr.mxu0 0.0
    %1144 = vmatpush1.msra.mxu0 0.0
    %1145 = vmatprep.subr.mxu0 0.0
    %1146 = vmatpush1.msra.mxu0 0.0
    %1147 = vmatprep.subr.mxu0 0.0
    %1148 = vmatpush1.msra.mxu0 0.0
    %1149 = vmatprep.subr.mxu0 0.0
    %1150 = vmatpush1.msra.mxu0 0.0
    %1151 = vmatprep.subr.mxu0 0.0
    %1152 = vmatpush1.msra.mxu0 0.0
    %1153 = vmatprep.subr.mxu0 0.0
    %1154 = vmatpush1.msra.mxu0 0.0
    %1155 = vmatprep.subr.mxu0 0.0
    %1156 = vmatpush1.msra.mxu0 0.0
    %1157 = vmatprep.subr.mxu0 0.0
    %1158 = vmatpush1.msra.mxu0 0.0
    %1159 = vmatprep.subr.mxu0 0.0
    %1160 = vmatpush1.msra.mxu0 0.0
    %1161 = vmatprep.subr.mxu0 0.0
    %1162 = vmatpush1.msra.mxu0 0.0
    %1163 = vmatprep.subr.mxu0 0.0
    %1164 = vmatpush1.msra.mxu0 0.0
    %1165 = vmatprep.subr.mxu0 0.0
    %1166 = vmatpush1.msra.mxu0 0.0
    %1167 = vmatprep.subr.mxu0 0.0
    %1168 = vmatpush1.msra.mxu0 0.0
    %1169 = vmatprep.subr.mxu0 0.0
    %1170 = vmatpush1.msra.mxu0 0.0
    %1171 = vmatprep.subr.mxu0 0.0
    %1172 = vmatpush1.msra.mxu0 0.0
    %1173 = vmatprep.subr.mxu0 0.0
    %1174 = vmatpush1.msra.mxu0 0.0
    %1175 = vmatprep.subr.mxu0 0.0
    %1176 = vmatpush1.msra.mxu0 0.0
    %1177 = vmatprep.subr.mxu0 0.0
    %1178 = vmatpush1.msra.mxu0 0.0
    %1179 = vmatprep.subr.mxu0 0.0
    %1180 = vmatpush1.msra.mxu0 0.0
    %1181 = vmatprep.subr.mxu0 0.0
    %1182 = vmatpush1.msra.mxu0 0.0
    %1183 = vmatprep.subr.mxu0 0.0
    %1184 = vmatpush1.msra.mxu0 0.0
    %1185 = vmatprep.subr.mxu0 0.0
    %1186 = vmatpush1.msra.mxu0 0.0
    %1187 = vmatprep.subr.mxu0 0.0
    %1188 = vmatpush1.msra.mxu0 0.0
    %1189 = vmatprep.subr.mxu0 0.0
    %1190 = vmatpush1.msra.mxu0 0.0
    %1191 = vmatprep.subr.mxu0 0.0
    %1192 = vmatpush1.msra.mxu0 0.0
    %1193 = vmatprep.subr.mxu0 0.0
    %1194 = vmatpush1.msra.mxu0 0.0
    %1195 = vmatprep.subr.mxu0 0.0
    %1196 = vmatpush1.msra.mxu0 0.0
    %1197 = vmatprep.mubr.f32.mxu0 0.0
    %1198 = vmatmul.mubr.f32.gmra.mrb[0].mxu0 %v1048
    %v1199 = vpop.f32.mrb[0].mxu0
    %v1200 = vadd.f32 0.0, %v1199
    %v1201 = vpop.f32.mrb[0].mxu0
    %v1202 = vadd.f32 0.0, %v1201
    %1203 = vdwg.mxu0
    %v1204 = vadd.f32 %v1001, %v1129
    %v1205 = vadd.f32 %v1002, %v1131
    %v1206 = vadd.f32 %v1003, %v1200
    %v1207 = vadd.f32 %v1004, %v1202
    %1208 = vrot.lane.b32.xlu0 %v18, 113
    %v1209 = vpop.permute.xlu0 %1208
    %1210 = vrot.lane.b32.xlu0 %v28, 113
    %v1211 = vpop.permute.xlu0 %1210
    %1212 = vrot.lane.b32.xlu0 %v19, 113
    %v1213 = vpop.permute.xlu0 %1212
    %1214 = vrot.lane.b32.xlu0 %v29, 113
    %v1215 = vpop.permute.xlu0 %1214
    %vm1216 = vcmp.lt.s32.totalorder %v41, 113
    %v1217 = vsel %vm1216, %v1213, %v1215
    %v1218 = vsel %vm1216, %v1211, %v1213
    %v1219 = vsel %vm1216, %v1209, %v1211
    %v1220 = vsel %vm1216, %v1215, %v1209
    %s1221 = scalar_lea.vmem %s3, 5
    %v1222 = vld [vmem:[%s1221] ss:$8 sm:$0xf]
    %v1224 = vlaneseq
    %v1225 = vshrl.u32 %v1224, 7
    %v1226 = vsub.s32 0, %v1225
    %v1227 = vrot.slane %v1222, %v1226
    %v1228 = vlaneseq
    %v1229 = vshrl.u32 %v1228, 7
    %v1230 = vsub.s32 1, %v1229
    %v1231 = vrot.slane %v1222, %v1230
    %v1232 = vlaneseq
    %v1233 = vshrl.u32 %v1232, 7
    %v1234 = vsub.s32 2, %v1233
    %v1235 = vrot.slane %v1222, %v1234
    %v1236 = vlaneseq
    %v1237 = vshrl.u32 %v1236, 7
    %v1238 = vsub.s32 3, %v1237
    %v1239 = vrot.slane %v1222, %v1238
    %v1244 = vmul.f32 %v1219, %v1227
    %v1245 = vmul.f32 %v1218, %v1231
    %v1246 = vmul.f32 %v1217, %v1235
    %v1247 = vmul.f32 %v1220, %v1239
    %s1248 = scalar_lea.vmem %s1, 48
    %v1249 = vld [vmem:[%s1248] sm:$0xff]
    %v1251 = vsel %vm74, %v1249, 0
    %v1254 = vsel %vm78, %v1244, 0
    %v1257 = vsel %vm78, %v1245, 0
    %v1260 = vsel %vm78, %v1246, 0
    %v1263 = vsel %vm78, %v1247, 0
    %1265 = vmatprep.subr.mxu0 %v1257
    %1266 = vmatpush1.msra.mxu0 %v1254
    %1267 = vmatprep.subr.mxu0 0.0
    %1268 = vmatpush1.msra.mxu0 0.0
    %1269 = vmatprep.subr.mxu0 0.0
    %1270 = vmatpush1.msra.mxu0 0.0
    %1271 = vmatprep.subr.mxu0 0.0
    %1272 = vmatpush1.msra.mxu0 0.0
    %1273 = vmatprep.subr.mxu0 0.0
    %1274 = vmatpush1.msra.mxu0 0.0
    %1275 = vmatprep.subr.mxu0 0.0
    %1276 = vmatpush1.msra.mxu0 0.0
    %1277 = vmatprep.subr.mxu0 0.0
    %1278 = vmatpush1.msra.mxu0 0.0
    %1279 = vmatprep.subr.mxu0 0.0
    %1280 = vmatpush1.msra.mxu0 0.0
    %1281 = vmatprep.subr.mxu0 0.0
    %1282 = vmatpush1.msra.mxu0 0.0
    %1283 = vmatprep.subr.mxu0 0.0
    %1284 = vmatpush1.msra.mxu0 0.0
    %1285 = vmatprep.subr.mxu0 0.0
    %1286 = vmatpush1.msra.mxu0 0.0
    %1287 = vmatprep.subr.mxu0 0.0
    %1288 = vmatpush1.msra.mxu0 0.0
    %1289 = vmatprep.subr.mxu0 0.0
    %1290 = vmatpush1.msra.mxu0 0.0
    %1291 = vmatprep.subr.mxu0 0.0
    %1292 = vmatpush1.msra.mxu0 0.0
    %1293 = vmatprep.subr.mxu0 0.0
    %1294 = vmatpush1.msra.mxu0 0.0
    %1295 = vmatprep.subr.mxu0 0.0
    %1296 = vmatpush1.msra.mxu0 0.0
    %1297 = vmatprep.subr.mxu0 0.0
    %1298 = vmatpush1.msra.mxu0 0.0
    %1299 = vmatprep.subr.mxu0 0.0
    %1300 = vmatpush1.msra.mxu0 0.0
    %1301 = vmatprep.subr.mxu0 0.0
    %1302 = vmatpush1.msra.mxu0 0.0
    %1303 = vmatprep.subr.mxu0 0.0
    %1304 = vmatpush1.msra.mxu0 0.0
    %1305 = vmatprep.subr.mxu0 0.0
    %1306 = vmatpush1.msra.mxu0 0.0
    %1307 = vmatprep.subr.mxu0 0.0
    %1308 = vmatpush1.msra.mxu0 0.0
    %1309 = vmatprep.subr.mxu0 0.0
    %1310 = vmatpush1.msra.mxu0 0.0
    %1311 = vmatprep.subr.mxu0 0.0
    %1312 = vmatpush1.msra.mxu0 0.0
    %1313 = vmatprep.subr.mxu0 0.0
    %1314 = vmatpush1.msra.mxu0 0.0
    %1315 = vmatprep.subr.mxu0 0.0
    %1316 = vmatpush1.msra.mxu0 0.0
    %1317 = vmatprep.subr.mxu0 0.0
    %1318 = vmatpush1.msra.mxu0 0.0
    %1319 = vmatprep.subr.mxu0 0.0
    %1320 = vmatpush1.msra.mxu0 0.0
    %1321 = vmatprep.subr.mxu0 0.0
    %1322 = vmatpush1.msra.mxu0 0.0
    %1323 = vmatprep.subr.mxu0 0.0
    %1324 = vmatpush1.msra.mxu0 0.0
    %1325 = vmatprep.subr.mxu0 0.0
    %1326 = vmatpush1.msra.mxu0 0.0
    %1327 = vmatprep.subr.mxu0 0.0
    %1328 = vmatpush1.msra.mxu0 0.0
    %1329 = vmatprep.mubr.f32.mxu0 0.0
    %1330 = vmatmul.mubr.f32.gmra.mrb[0].mxu0 %v1251
    %v1331 = vpop.f32.mrb[0].mxu0
    %v1332 = vadd.f32 0.0, %v1331
    %v1333 = vpop.f32.mrb[0].mxu0
    %v1334 = vadd.f32 0.0, %v1333
    %1335 = vdwg.mxu0
    %1336 = vmatprep.subr.mxu0 %v1263
    %1337 = vmatpush1.msra.mxu0 %v1260
    %1338 = vmatprep.subr.mxu0 0.0
    %1339 = vmatpush1.msra.mxu0 0.0
    %1340 = vmatprep.subr.mxu0 0.0
    %1341 = vmatpush1.msra.mxu0 0.0
    %1342 = vmatprep.subr.mxu0 0.0
    %1343 = vmatpush1.msra.mxu0 0.0
    %1344 = vmatprep.subr.mxu0 0.0
    %1345 = vmatpush1.msra.mxu0 0.0
    %1346 = vmatprep.subr.mxu0 0.0
    %1347 = vmatpush1.msra.mxu0 0.0
    %1348 = vmatprep.subr.mxu0 0.0
    %1349 = vmatpush1.msra.mxu0 0.0
    %1350 = vmatprep.subr.mxu0 0.0
    %1351 = vmatpush1.msra.mxu0 0.0
    %1352 = vmatprep.subr.mxu0 0.0
    %1353 = vmatpush1.msra.mxu0 0.0
    %1354 = vmatprep.subr.mxu0 0.0
    %1355 = vmatpush1.msra.mxu0 0.0
    %1356 = vmatprep.subr.mxu0 0.0
    %1357 = vmatpush1.msra.mxu0 0.0
    %1358 = vmatprep.subr.mxu0 0.0
    %1359 = vmatpush1.msra.mxu0 0.0
    %1360 = vmatprep.subr.mxu0 0.0
    %1361 = vmatpush1.msra.mxu0 0.0
    %1362 = vmatprep.subr.mxu0 0.0
    %1363 = vmatpush1.msra.mxu0 0.0
    %1364 = vmatprep.subr.mxu0 0.0
    %1365 = vmatpush1.msra.mxu0 0.0
    %1366 = vmatprep.subr.mxu0 0.0
    %1367 = vmatpush1.msra.mxu0 0.0
    %1368 = vmatprep.subr.mxu0 0.0
    %1369 = vmatpush1.msra.mxu0 0.0
    %1370 = vmatprep.subr.mxu0 0.0
    %1371 = vmatpush1.msra.mxu0 0.0
    %1372 = vmatprep.subr.mxu0 0.0
    %1373 = vmatpush1.msra.mxu0 0.0
    %1374 = vmatprep.subr.mxu0 0.0
    %1375 = vmatpush1.msra.mxu0 0.0
    %1376 = vmatprep.subr.mxu0 0.0
    %1377 = vmatpush1.msra.mxu0 0.0
    %1378 = vmatprep.subr.mxu0 0.0
    %1379 = vmatpush1.msra.mxu0 0.0
    %1380 = vmatprep.subr.mxu0 0.0
    %1381 = vmatpush1.msra.mxu0 0.0
    %1382 = vmatprep.subr.mxu0 0.0
    %1383 = vmatpush1.msra.mxu0 0.0
    %1384 = vmatprep.subr.mxu0 0.0
    %1385 = vmatpush1.msra.mxu0 0.0
    %1386 = vmatprep.subr.mxu0 0.0
    %1387 = vmatpush1.msra.mxu0 0.0
    %1388 = vmatprep.subr.mxu0 0.0
    %1389 = vmatpush1.msra.mxu0 0.0
    %1390 = vmatprep.subr.mxu0 0.0
    %1391 = vmatpush1.msra.mxu0 0.0
    %1392 = vmatprep.subr.mxu0 0.0
    %1393 = vmatpush1.msra.mxu0 0.0
    %1394 = vmatprep.subr.mxu0 0.0
    %1395 = vmatpush1.msra.mxu0 0.0
    %1396 = vmatprep.subr.mxu0 0.0
    %1397 = vmatpush1.msra.mxu0 0.0
    %1398 = vmatprep.subr.mxu0 0.0
    %1399 = vmatpush1.msra.mxu0 0.0
    %1400 = vmatprep.mubr.f32.mxu0 0.0
    %1401 = vmatmul.mubr.f32.gmra.mrb[0].mxu0 %v1251
    %v1402 = vpop.f32.mrb[0].mxu0
    %v1403 = vadd.f32 0.0, %v1402
    %v1404 = vpop.f32.mrb[0].mxu0
    %v1405 = vadd.f32 0.0, %v1404
    %1406 = vdwg.mxu0
    %v1407 = vadd.f32 %v1204, %v1332
    %v1408 = vadd.f32 %v1205, %v1334
    %v1409 = vadd.f32 %v1206, %v1403
    %v1410 = vadd.f32 %v1207, %v1405
    %1411 = vrot.lane.b32.xlu0 %v18, 112
    %v1412 = vpop.permute.xlu0 %1411
    %1413 = vrot.lane.b32.xlu0 %v28, 112
    %v1414 = vpop.permute.xlu0 %1413
    %1415 = vrot.lane.b32.xlu0 %v19, 112
    %v1416 = vpop.permute.xlu0 %1415
    %1417 = vrot.lane.b32.xlu0 %v29, 112
    %v1418 = vpop.permute.xlu0 %1417
    %vm1419 = vcmp.lt.s32.totalorder %v41, 112
    %v1420 = vsel %vm1419, %v1416, %v1418
    %v1421 = vsel %vm1419, %v1414, %v1416
    %v1422 = vsel %vm1419, %v1412, %v1414
    %v1423 = vsel %vm1419, %v1418, %v1412
    %s1424 = scalar_lea.vmem %s3, 6
    %v1425 = vld [vmem:[%s1424] ss:$8 sm:$0xf]
    %v1427 = vlaneseq
    %v1428 = vshrl.u32 %v1427, 7
    %v1429 = vsub.s32 0, %v1428
    %v1430 = vrot.slane %v1425, %v1429
    %v1431 = vlaneseq
    %v1432 = vshrl.u32 %v1431, 7
    %v1433 = vsub.s32 1, %v1432
    %v1434 = vrot.slane %v1425, %v1433
    %v1435 = vlaneseq
    %v1436 = vshrl.u32 %v1435, 7
    %v1437 = vsub.s32 2, %v1436
    %v1438 = vrot.slane %v1425, %v1437
    %v1439 = vlaneseq
    %v1440 = vshrl.u32 %v1439, 7
    %v1441 = vsub.s32 3, %v1440
    %v1442 = vrot.slane %v1425, %v1441
    %v1447 = vmul.f32 %v1422, %v1430
    %v1448 = vmul.f32 %v1421, %v1434
    %v1449 = vmul.f32 %v1420, %v1438
    %v1450 = vmul.f32 %v1423, %v1442
    %s1451 = scalar_lea.vmem %s1, 56
    %v1452 = vld [vmem:[%s1451] sm:$0xff]
    %v1454 = vsel %vm74, %v1452, 0
    %v1457 = vsel %vm78, %v1447, 0
    %v1460 = vsel %vm78, %v1448, 0
    %v1463 = vsel %vm78, %v1449, 0
    %v1466 = vsel %vm78, %v1450, 0
    %1468 = vmatprep.subr.mxu0 %v1460
    %1469 = vmatpush1.msra.mxu0 %v1457
    %1470 = vmatprep.subr.mxu0 0.0
    %1471 = vmatpush1.msra.mxu0 0.0
    %1472 = vmatprep.subr.mxu0 0.0
    %1473 = vmatpush1.msra.mxu0 0.0
    %1474 = vmatprep.subr.mxu0 0.0
    %1475 = vmatpush1.msra.mxu0 0.0
    %1476 = vmatprep.subr.mxu0 0.0
    %1477 = vmatpush1.msra.mxu0 0.0
    %1478 = vmatprep.subr.mxu0 0.0
    %1479 = vmatpush1.msra.mxu0 0.0
    %1480 = vmatprep.subr.mxu0 0.0
    %1481 = vmatpush1.msra.mxu0 0.0
    %1482 = vmatprep.subr.mxu0 0.0
    %1483 = vmatpush1.msra.mxu0 0.0
    %1484 = vmatprep.subr.mxu0 0.0
    %1485 = vmatpush1.msra.mxu0 0.0
    %1486 = vmatprep.subr.mxu0 0.0
    %1487 = vmatpush1.msra.mxu0 0.0
    %1488 = vmatprep.subr.mxu0 0.0
    %1489 = vmatpush1.msra.mxu0 0.0
    %1490 = vmatprep.subr.mxu0 0.0
    %1491 = vmatpush1.msra.mxu0 0.0
    %1492 = vmatprep.subr.mxu0 0.0
    %1493 = vmatpush1.msra.mxu0 0.0
    %1494 = vmatprep.subr.mxu0 0.0
    %1495 = vmatpush1.msra.mxu0 0.0
    %1496 = vmatprep.subr.mxu0 0.0
    %1497 = vmatpush1.msra.mxu0 0.0
    %1498 = vmatprep.subr.mxu0 0.0
    %1499 = vmatpush1.msra.mxu0 0.0
    %1500 = vmatprep.subr.mxu0 0.0
    %1501 = vmatpush1.msra.mxu0 0.0
    %1502 = vmatprep.subr.mxu0 0.0
    %1503 = vmatpush1.msra.mxu0 0.0
    %1504 = vmatprep.subr.mxu0 0.0
    %1505 = vmatpush1.msra.mxu0 0.0
    %1506 = vmatprep.subr.mxu0 0.0
    %1507 = vmatpush1.msra.mxu0 0.0
    %1508 = vmatprep.subr.mxu0 0.0
    %1509 = vmatpush1.msra.mxu0 0.0
    %1510 = vmatprep.subr.mxu0 0.0
    %1511 = vmatpush1.msra.mxu0 0.0
    %1512 = vmatprep.subr.mxu0 0.0
    %1513 = vmatpush1.msra.mxu0 0.0
    %1514 = vmatprep.subr.mxu0 0.0
    %1515 = vmatpush1.msra.mxu0 0.0
    %1516 = vmatprep.subr.mxu0 0.0
    %1517 = vmatpush1.msra.mxu0 0.0
    %1518 = vmatprep.subr.mxu0 0.0
    %1519 = vmatpush1.msra.mxu0 0.0
    %1520 = vmatprep.subr.mxu0 0.0
    %1521 = vmatpush1.msra.mxu0 0.0
    %1522 = vmatprep.subr.mxu0 0.0
    %1523 = vmatpush1.msra.mxu0 0.0
    %1524 = vmatprep.subr.mxu0 0.0
    %1525 = vmatpush1.msra.mxu0 0.0
    %1526 = vmatprep.subr.mxu0 0.0
    %1527 = vmatpush1.msra.mxu0 0.0
    %1528 = vmatprep.subr.mxu0 0.0
    %1529 = vmatpush1.msra.mxu0 0.0
    %1530 = vmatprep.subr.mxu0 0.0
    %1531 = vmatpush1.msra.mxu0 0.0
    %1532 = vmatprep.mubr.f32.mxu0 0.0
    %1533 = vmatmul.mubr.f32.gmra.mrb[0].mxu0 %v1454
    %v1534 = vpop.f32.mrb[0].mxu0
    %v1535 = vadd.f32 0.0, %v1534
    %v1536 = vpop.f32.mrb[0].mxu0
    %v1537 = vadd.f32 0.0, %v1536
    %1538 = vdwg.mxu0
    %1539 = vmatprep.subr.mxu0 %v1466
    %1540 = vmatpush1.msra.mxu0 %v1463
    %1541 = vmatprep.subr.mxu0 0.0
    %1542 = vmatpush1.msra.mxu0 0.0
    %1543 = vmatprep.subr.mxu0 0.0
    %1544 = vmatpush1.msra.mxu0 0.0
    %1545 = vmatprep.subr.mxu0 0.0
    %1546 = vmatpush1.msra.mxu0 0.0
    %1547 = vmatprep.subr.mxu0 0.0
    %1548 = vmatpush1.msra.mxu0 0.0
    %1549 = vmatprep.subr.mxu0 0.0
    %1550 = vmatpush1.msra.mxu0 0.0
    %1551 = vmatprep.subr.mxu0 0.0
    %1552 = vmatpush1.msra.mxu0 0.0
    %1553 = vmatprep.subr.mxu0 0.0
    %1554 = vmatpush1.msra.mxu0 0.0
    %1555 = vmatprep.subr.mxu0 0.0
    %1556 = vmatpush1.msra.mxu0 0.0
    %1557 = vmatprep.subr.mxu0 0.0
    %1558 = vmatpush1.msra.mxu0 0.0
    %1559 = vmatprep.subr.mxu0 0.0
    %1560 = vmatpush1.msra.mxu0 0.0
    %1561 = vmatprep.subr.mxu0 0.0
    %1562 = vmatpush1.msra.mxu0 0.0
    %1563 = vmatprep.subr.mxu0 0.0
    %1564 = vmatpush1.msra.mxu0 0.0
    %1565 = vmatprep.subr.mxu0 0.0
    %1566 = vmatpush1.msra.mxu0 0.0
    %1567 = vmatprep.subr.mxu0 0.0
    %1568 = vmatpush1.msra.mxu0 0.0
    %1569 = vmatprep.subr.mxu0 0.0
    %1570 = vmatpush1.msra.mxu0 0.0
    %1571 = vmatprep.subr.mxu0 0.0
    %1572 = vmatpush1.msra.mxu0 0.0
    %1573 = vmatprep.subr.mxu0 0.0
    %1574 = vmatpush1.msra.mxu0 0.0
    %1575 = vmatprep.subr.mxu0 0.0
    %1576 = vmatpush1.msra.mxu0 0.0
    %1577 = vmatprep.subr.mxu0 0.0
    %1578 = vmatpush1.msra.mxu0 0.0
    %1579 = vmatprep.subr.mxu0 0.0
    %1580 = vmatpush1.msra.mxu0 0.0
    %1581 = vmatprep.subr.mxu0 0.0
    %1582 = vmatpush1.msra.mxu0 0.0
    %1583 = vmatprep.subr.mxu0 0.0
    %1584 = vmatpush1.msra.mxu0 0.0
    %1585 = vmatprep.subr.mxu0 0.0
    %1586 = vmatpush1.msra.mxu0 0.0
    %1587 = vmatprep.subr.mxu0 0.0
    %1588 = vmatpush1.msra.mxu0 0.0
    %1589 = vmatprep.subr.mxu0 0.0
    %1590 = vmatpush1.msra.mxu0 0.0
    %1591 = vmatprep.subr.mxu0 0.0
    %1592 = vmatpush1.msra.mxu0 0.0
    %1593 = vmatprep.subr.mxu0 0.0
    %1594 = vmatpush1.msra.mxu0 0.0
    %1595 = vmatprep.subr.mxu0 0.0
    %1596 = vmatpush1.msra.mxu0 0.0
    %1597 = vmatprep.subr.mxu0 0.0
    %1598 = vmatpush1.msra.mxu0 0.0
    %1599 = vmatprep.subr.mxu0 0.0
    %1600 = vmatpush1.msra.mxu0 0.0
    %1601 = vmatprep.subr.mxu0 0.0
    %1602 = vmatpush1.msra.mxu0 0.0
    %1603 = vmatprep.mubr.f32.mxu0 0.0
    %1604 = vmatmul.mubr.f32.gmra.mrb[0].mxu0 %v1454
    %v1605 = vpop.f32.mrb[0].mxu0
    %v1606 = vadd.f32 0.0, %v1605
    %v1607 = vpop.f32.mrb[0].mxu0
    %v1608 = vadd.f32 0.0, %v1607
    %1609 = vdwg.mxu0
    %v1610 = vadd.f32 %v1407, %v1535
    %v1611 = vadd.f32 %v1408, %v1537
    %v1612 = vadd.f32 %v1409, %v1606
    %v1613 = vadd.f32 %v1410, %v1608
    %1614 = vrot.lane.b32.xlu0 %v18, 111
    %v1615 = vpop.permute.xlu0 %1614
    %1616 = vrot.lane.b32.xlu0 %v28, 111
    %v1617 = vpop.permute.xlu0 %1616
    %1618 = vrot.lane.b32.xlu0 %v19, 111
    %v1619 = vpop.permute.xlu0 %1618
    %1620 = vrot.lane.b32.xlu0 %v29, 111
    %v1621 = vpop.permute.xlu0 %1620
    %vm1622 = vcmp.lt.s32.totalorder %v41, 111
    %v1623 = vsel %vm1622, %v1619, %v1621
    %v1624 = vsel %vm1622, %v1617, %v1619
    %v1625 = vsel %vm1622, %v1615, %v1617
    %v1626 = vsel %vm1622, %v1621, %v1615
    %s1627 = scalar_lea.vmem %s3, 7
    %v1628 = vld [vmem:[%s1627] ss:$8 sm:$0xf]
    %v1630 = vlaneseq
    %v1631 = vshrl.u32 %v1630, 7
    %v1632 = vsub.s32 0, %v1631
    %v1633 = vrot.slane %v1628, %v1632
    %v1634 = vlaneseq
    %v1635 = vshrl.u32 %v1634, 7
    %v1636 = vsub.s32 1, %v1635
    %v1637 = vrot.slane %v1628, %v1636
    %v1638 = vlaneseq
    %v1639 = vshrl.u32 %v1638, 7
    %v1640 = vsub.s32 2, %v1639
    %v1641 = vrot.slane %v1628, %v1640
    %v1642 = vlaneseq
    %v1643 = vshrl.u32 %v1642, 7
    %v1644 = vsub.s32 3, %v1643
    %v1645 = vrot.slane %v1628, %v1644
    %v1650 = vmul.f32 %v1625, %v1633
    %v1651 = vmul.f32 %v1624, %v1637
    %v1652 = vmul.f32 %v1623, %v1641
    %v1653 = vmul.f32 %v1626, %v1645
    %s1654 = scalar_lea.vmem %s1, 64
    %v1655 = vld [vmem:[%s1654] sm:$0xff]
    %v1657 = vsel %vm74, %v1655, 0
    %v1660 = vsel %vm78, %v1650, 0
    %v1663 = vsel %vm78, %v1651, 0
    %v1666 = vsel %vm78, %v1652, 0
    %v1669 = vsel %vm78, %v1653, 0
    %1671 = vmatprep.subr.mxu0 %v1663
    %1672 = vmatpush1.msra.mxu0 %v1660
    %1673 = vmatprep.subr.mxu0 0.0
    %1674 = vmatpush1.msra.mxu0 0.0
    %1675 = vmatprep.subr.mxu0 0.0
    %1676 = vmatpush1.msra.mxu0 0.0
    %1677 = vmatprep.subr.mxu0 0.0
    %1678 = vmatpush1.msra.mxu0 0.0
    %1679 = vmatprep.subr.mxu0 0.0
    %1680 = vmatpush1.msra.mxu0 0.0
    %1681 = vmatprep.subr.mxu0 0.0
    %1682 = vmatpush1.msra.mxu0 0.0
    %1683 = vmatprep.subr.mxu0 0.0
    %1684 = vmatpush1.msra.mxu0 0.0
    %1685 = vmatprep.subr.mxu0 0.0
    %1686 = vmatpush1.msra.mxu0 0.0
    %1687 = vmatprep.subr.mxu0 0.0
    %1688 = vmatpush1.msra.mxu0 0.0
    %1689 = vmatprep.subr.mxu0 0.0
    %1690 = vmatpush1.msra.mxu0 0.0
    %1691 = vmatprep.subr.mxu0 0.0
    %1692 = vmatpush1.msra.mxu0 0.0
    %1693 = vmatprep.subr.mxu0 0.0
    %1694 = vmatpush1.msra.mxu0 0.0
    %1695 = vmatprep.subr.mxu0 0.0
    %1696 = vmatpush1.msra.mxu0 0.0
    %1697 = vmatprep.subr.mxu0 0.0
    %1698 = vmatpush1.msra.mxu0 0.0
    %1699 = vmatprep.subr.mxu0 0.0
    %1700 = vmatpush1.msra.mxu0 0.0
    %1701 = vmatprep.subr.mxu0 0.0
    %1702 = vmatpush1.msra.mxu0 0.0
    %1703 = vmatprep.subr.mxu0 0.0
    %1704 = vmatpush1.msra.mxu0 0.0
    %1705 = vmatprep.subr.mxu0 0.0
    %1706 = vmatpush1.msra.mxu0 0.0
    %1707 = vmatprep.subr.mxu0 0.0
    %1708 = vmatpush1.msra.mxu0 0.0
    %1709 = vmatprep.subr.mxu0 0.0
    %1710 = vmatpush1.msra.mxu0 0.0
    %1711 = vmatprep.subr.mxu0 0.0
    %1712 = vmatpush1.msra.mxu0 0.0
    %1713 = vmatprep.subr.mxu0 0.0
    %1714 = vmatpush1.msra.mxu0 0.0
    %1715 = vmatprep.subr.mxu0 0.0
    %1716 = vmatpush1.msra.mxu0 0.0
    %1717 = vmatprep.subr.mxu0 0.0
    %1718 = vmatpush1.msra.mxu0 0.0
    %1719 = vmatprep.subr.mxu0 0.0
    %1720 = vmatpush1.msra.mxu0 0.0
    %1721 = vmatprep.subr.mxu0 0.0
    %1722 = vmatpush1.msra.mxu0 0.0
    %1723 = vmatprep.subr.mxu0 0.0
    %1724 = vmatpush1.msra.mxu0 0.0
    %1725 = vmatprep.subr.mxu0 0.0
    %1726 = vmatpush1.msra.mxu0 0.0
    %1727 = vmatprep.subr.mxu0 0.0
    %1728 = vmatpush1.msra.mxu0 0.0
    %1729 = vmatprep.subr.mxu0 0.0
    %1730 = vmatpush1.msra.mxu0 0.0
    %1731 = vmatprep.subr.mxu0 0.0
    %1732 = vmatpush1.msra.mxu0 0.0
    %1733 = vmatprep.subr.mxu0 0.0
    %1734 = vmatpush1.msra.mxu0 0.0
    %1735 = vmatprep.mubr.f32.mxu0 0.0
    %1736 = vmatmul.mubr.f32.gmra.mrb[0].mxu0 %v1657
    %v1737 = vpop.f32.mrb[0].mxu0
    %v1738 = vadd.f32 0.0, %v1737
    %v1739 = vpop.f32.mrb[0].mxu0
    %v1740 = vadd.f32 0.0, %v1739
    %1741 = vdwg.mxu0
    %1742 = vmatprep.subr.mxu0 %v1669
    %1743 = vmatpush1.msra.mxu0 %v1666
    %1744 = vmatprep.subr.mxu0 0.0
    %1745 = vmatpush1.msra.mxu0 0.0
    %1746 = vmatprep.subr.mxu0 0.0
    %1747 = vmatpush1.msra.mxu0 0.0
    %1748 = vmatprep.subr.mxu0 0.0
    %1749 = vmatpush1.msra.mxu0 0.0
    %1750 = vmatprep.subr.mxu0 0.0
    %1751 = vmatpush1.msra.mxu0 0.0
    %1752 = vmatprep.subr.mxu0 0.0
    %1753 = vmatpush1.msra.mxu0 0.0
    %1754 = vmatprep.subr.mxu0 0.0
    %1755 = vmatpush1.msra.mxu0 0.0
    %1756 = vmatprep.subr.mxu0 0.0
    %1757 = vmatpush1.msra.mxu0 0.0
    %1758 = vmatprep.subr.mxu0 0.0
    %1759 = vmatpush1.msra.mxu0 0.0
    %1760 = vmatprep.subr.mxu0 0.0
    %1761 = vmatpush1.msra.mxu0 0.0
    %1762 = vmatprep.subr.mxu0 0.0
    %1763 = vmatpush1.msra.mxu0 0.0
    %1764 = vmatprep.subr.mxu0 0.0
    %1765 = vmatpush1.msra.mxu0 0.0
    %1766 = vmatprep.subr.mxu0 0.0
    %1767 = vmatpush1.msra.mxu0 0.0
    %1768 = vmatprep.subr.mxu0 0.0
    %1769 = vmatpush1.msra.mxu0 0.0
    %1770 = vmatprep.subr.mxu0 0.0
    %1771 = vmatpush1.msra.mxu0 0.0
    %1772 = vmatprep.subr.mxu0 0.0
    %1773 = vmatpush1.msra.mxu0 0.0
    %1774 = vmatprep.subr.mxu0 0.0
    %1775 = vmatpush1.msra.mxu0 0.0
    %1776 = vmatprep.subr.mxu0 0.0
    %1777 = vmatpush1.msra.mxu0 0.0
    %1778 = vmatprep.subr.mxu0 0.0
    %1779 = vmatpush1.msra.mxu0 0.0
    %1780 = vmatprep.subr.mxu0 0.0
    %1781 = vmatpush1.msra.mxu0 0.0
    %1782 = vmatprep.subr.mxu0 0.0
    %1783 = vmatpush1.msra.mxu0 0.0
    %1784 = vmatprep.subr.mxu0 0.0
    %1785 = vmatpush1.msra.mxu0 0.0
    %1786 = vmatprep.subr.mxu0 0.0
    %1787 = vmatpush1.msra.mxu0 0.0
    %1788 = vmatprep.subr.mxu0 0.0
    %1789 = vmatpush1.msra.mxu0 0.0
    %1790 = vmatprep.subr.mxu0 0.0
    %1791 = vmatpush1.msra.mxu0 0.0
    %1792 = vmatprep.subr.mxu0 0.0
    %1793 = vmatpush1.msra.mxu0 0.0
    %1794 = vmatprep.subr.mxu0 0.0
    %1795 = vmatpush1.msra.mxu0 0.0
    %1796 = vmatprep.subr.mxu0 0.0
    %1797 = vmatpush1.msra.mxu0 0.0
    %1798 = vmatprep.subr.mxu0 0.0
    %1799 = vmatpush1.msra.mxu0 0.0
    %1800 = vmatprep.subr.mxu0 0.0
    %1801 = vmatpush1.msra.mxu0 0.0
    %1802 = vmatprep.subr.mxu0 0.0
    %1803 = vmatpush1.msra.mxu0 0.0
    %1804 = vmatprep.subr.mxu0 0.0
    %1805 = vmatpush1.msra.mxu0 0.0
    %1806 = vmatprep.mubr.f32.mxu0 0.0
    %1807 = vmatmul.mubr.f32.gmra.mrb[0].mxu0 %v1657
    %v1808 = vpop.f32.mrb[0].mxu0
    %v1809 = vadd.f32 0.0, %v1808
    %v1810 = vpop.f32.mrb[0].mxu0
    %v1811 = vadd.f32 0.0, %v1810
    %1812 = vdwg.mxu0
    %v1813 = vadd.f32 %v1610, %v1738
    %v1814 = vadd.f32 %v1611, %v1740
    %v1815 = vadd.f32 %v1612, %v1809
    %v1816 = vadd.f32 %v1613, %v1811
    %v1817 = vmax.f32 %v1813, 0.0
    %v1818 = vmax.f32 %v1814, 0.0
    %v1819 = vmax.f32 %v1815, 0.0
    %v1820 = vmax.f32 %v1816, 0.0
    %1821 = vst [vmem:[#allocation2] sm:$0xff] %v1817
    %1822 = vst [vmem:[#allocation2 + $0x8] sm:$0xff] %v1818
    %1823 = vst [vmem:[#allocation2 + $0x10] sm:$0xff] %v1819
    %1824 = vst [vmem:[#allocation2 + $0x18] sm:$0xff] %v1820
    // Predicated region
    $region18: #{tpu_custom_call.1} parent=1 // pred_check
      _
    $region19: #{tpu_custom_call.1} parent=1 // pred_check_branch
      %1826 = sbr.rel (0) target = $region21
    $region20: #{tpu_custom_call.1} parent=1 // pred_region
      %s1828 = ssub.s32 512, 512
      %1829 = vsyncadd [#allocation3], %s1828
      %s1831 = sshll.u32 [#allocation2], 4
      %s1832 = int_to_ptr.vmem [resolvable:$true] %s1831
      %1834 = dma.vmem_to_hbm [thread:$0]  %s1832, 512, %s4, [#allocation3]
    $region21: #{tpu_custom_call.1} parent=1 // pred_fallthru
      _
    // Predicated region
    $region22: #{tpu_custom_call.1} parent=1 // pred_check
      _
    $region23: #{tpu_custom_call.1} parent=1 // pred_check_branch
      %1836 = sbr.rel (0) target = $region25
    $region24: #{tpu_custom_call.1} parent=1 // pred_region
      %1837 = dma.done [#allocation3], 512
    $region25: #{tpu_custom_call.1} parent=1 // pred_fallthru
      _
    %1838 = vsyncpa [#allocation3], 1

</llo_original>
